<compile_context>
chip_gen: v7x
topology: tpu7x:2x2x1
jax: 0.10.0
libtpu: 0.0.40
codegen_flags: <defaults>
</compile_context>

<pallas_src>
import functools

import jax
import jax.numpy as jnp
from jax.experimental import pallas as pl
from jax.experimental.pallas import tpu as pltpu


def _supervisor_kernel(x_ref, w_ih0_ref, w_hh0_ref, b_gi0_ref, b_gh0_ref,
                       w_fused_ref, b_fused_ref, fc_w_ref, fc_b_ref,
                       out_ref, gi0_scr, *, seq_len, batch_pad, hidden, num_layer):
    """GRU stack (wavefront-pipelined) + Linear + sigmoid, fully resident in VMEM.

    Shapes (TBp = seq_len * batch_pad):
      x_ref       : (TBp, H)        bf16  time-major input, batch padded to Bp
      w_ih0_ref   : (H, 3H)         bf16  layer-0 input weights, cols [r|z|n]
      w_hh0_ref   : (H, 3H)         bf16  layer-0 hidden weights
      b_gi0_ref   : (1, 3H)         f32   b_ih0 with b_hh0 folded in for r,z
      b_gh0_ref   : (1, 3H)         f32   [0 | 0 | b_hn0]
      w_fused_ref : (max(L-1,1), 2H, 4H) bf16  fused [input|hidden] weights, layers>=1
      b_fused_ref : (max(L-1,1), 1, 4H)  f32   [b_ir+b_hr | b_iz+b_hz | b_in | b_hn]
      fc_w_ref    : (H, H)          bf16  pre-transposed (y = h @ fc_w)
      fc_b_ref    : (1, H)          f32
      out_ref     : (TBp, H)        f32   also used as the last layer's seq buffer
      gi0_scr     : (TBp, 3H)       f32   hoisted layer-0 input GEMM (+bias)
    """
    T, Bp, H, L = seq_len, batch_pad, hidden, num_layer
    f32, bf16 = jnp.float32, jnp.bfloat16

    # ---- Layer-0 input-path GEMM hoisted over all timesteps (no h dependence). ----
    gi0 = jnp.dot(x_ref[...], w_ih0_ref[...], preferred_element_type=f32)
    gi0_scr[...] = gi0 + b_gi0_ref[...]                    # bias folded once

    # Hoisted weight/bias loads (reused every wavefront step).
    w_hh0 = w_hh0_ref[...]                                 # (H, 3H) bf16
    b_gh0 = b_gh0_ref[...]                                 # (1, 3H) f32
    w_fused = [w_fused_ref[l - 1] for l in range(1, L)]    # (2H, 4H) bf16 each
    b_fused = [b_fused_ref[l - 1] for l in range(1, L)]    # (1, 4H) f32 each

    h32 = [jnp.zeros((Bp, H), f32) for _ in range(L)]      # recurrent state (f32)
    h16 = [jnp.zeros((Bp, H), bf16) for _ in range(L)]     # bf16 copy for MXU LHS

    # ---- Wavefront over the time diagonal: step s runs layer l at t = s - l. ----
    for s in range(T + L - 1):                             # static unroll (small T)
        prev32, prev16 = list(h32), list(h16)              # previous wavefront step
        for l in range(max(0, s - T + 1), min(L, s + 1)):
            t = s - l
            if l == 0:
                gi_t = gi0_scr[t * Bp:(t + 1) * Bp, :]                    # aligned tile
                gh = jnp.dot(prev16[0], w_hh0,
                             preferred_element_type=f32) + b_gh0          # (Bp, 3H)
                rz = jax.nn.sigmoid(gi_t[:, :2 * H] + gh[:, :2 * H])
                n = jnp.tanh(gi_t[:, 2 * H:] + rz[:, :H] * gh[:, 2 * H:])
            else:
                # Fused input+hidden GEMM: one MXU push per layer-step.
                lhs = jnp.concatenate([prev16[l - 1], prev16[l]], axis=-1)  # (Bp, 2H)
                g = jnp.dot(lhs, w_fused[l - 1],
                            preferred_element_type=f32) + b_fused[l - 1]    # (Bp, 4H)
                rz = jax.nn.sigmoid(g[:, :2 * H])
                n = jnp.tanh(g[:, 2 * H:3 * H] + rz[:, :H] * g[:, 3 * H:])
            z = rz[:, H:]
            h_new = n + z * (prev32[l] - n)                # == (1 - z) * n + z * h
            h32[l] = h_new
            h16[l] = h_new.astype(bf16)
            if l == L - 1:                                 # last layer -> FC input
                out_ref[t * Bp:(t + 1) * Bp, :] = h_new    # aligned full-tile store

    # ---- Final Linear + Sigmoid for every timestep in one matmul + one store. ----
    hseq = out_ref[...]                                    # (TBp, H) f32
    y = jnp.dot(hseq.astype(bf16), fc_w_ref[...],
                preferred_element_type=f32) + fc_b_ref[...]
    out_ref[...] = jax.nn.sigmoid(y)


def supervisor_forward(x, kp):
    """x: (T, B, H) float32 -> sigmoid(fc(GRU(x))): (T, B, H) float32."""
    T, B, H = x.shape
    L = int(kp["num_layer"])
    Bp = ((B + 7) // 8) * 8                               # pad batch to sublane tile
    xp = jnp.zeros((T, Bp, H), jnp.bfloat16).at[:, :B, :].set(x.astype(jnp.bfloat16))
    x2d = xp.reshape(T * Bp, H)                           # layout-only reshape in XLA
    kernel = functools.partial(_supervisor_kernel, seq_len=T, batch_pad=Bp,
                               hidden=H, num_layer=L)
    out = pl.pallas_call(
        kernel,
        out_shape=jax.ShapeDtypeStruct((T * Bp, H), jnp.float32),
        in_specs=[pl.BlockSpec(memory_space=pltpu.MemorySpace.VMEM)] * 9,
        out_specs=pl.BlockSpec(memory_space=pltpu.MemorySpace.VMEM),
        scratch_shapes=[pltpu.VMEM((T * Bp, 3 * H), jnp.float32)],   # gi0_scr
        compiler_params=pltpu.CompilerParams(vmem_limit_bytes=32 * 1024 * 1024),
    )(x2d, kp["w_ih0"], kp["w_hh0"], kp["b_gi0"], kp["b_gh0"],
      kp["w_fused"], kp["b_fused"], kp["fc_w"], kp["fc_b"])
    return out.reshape(T, Bp, H)[:, :B, :]


# ---------------- parameter setup (deterministic, PyTorch-shaped) ----------------

def init_params(key, hidden, num_layer):
    """PyTorch-layout params: weight_ih_l{k} (3H,H) rows ordered [r,z,n], etc."""
    k = 1.0 / (hidden ** 0.5)
    keys = iter(jax.random.split(key, 4 * num_layer + 2))
    w_ih, w_hh, b_ih, b_hh = [], [], [], []
    for _ in range(num_layer):
        w_ih.append(jax.random.uniform(next(keys), (3 * hidden, hidden),
                                       jnp.float32, -k, k))
        w_hh.append(jax.random.uniform(next(keys), (3 * hidden, hidden),
                                       jnp.float32, -k, k))
        b_ih.append(jax.random.uniform(next(keys), (3 * hidden,), jnp.float32, -k, k))
        b_hh.append(jax.random.uniform(next(keys), (3 * hidden,), jnp.float32, -k, k))
    fc_w = jax.random.uniform(next(keys), (hidden, hidden), jnp.float32, -k, k)
    fc_b = jax.random.uniform(next(keys), (hidden,), jnp.float32, -k, k)
    return dict(w_ih=jnp.stack(w_ih), w_hh=jnp.stack(w_hh),
                b_ih=jnp.stack(b_ih), b_hh=jnp.stack(b_hh),
                fc_w=fc_w, fc_b=fc_b)


def to_kernel_params(pt, hidden, num_layer):
    """PyTorch layout -> kernel layout: transposed, gate-packed, fused, bias-folded."""
    L, H = num_layer, hidden
    f32, bf16 = jnp.float32, jnp.bfloat16
    w_ih_t = jnp.transpose(pt["w_ih"], (0, 2, 1))         # (L, H, 3H), cols [r|z|n]
    w_hh_t = jnp.transpose(pt["w_hh"], (0, 2, 1))

    # Layer 0: input path is hoisted over T, so keep W_ih / W_hh separate.
    w_ih0 = w_ih_t[0].astype(bf16)
    w_hh0 = w_hh_t[0].astype(bf16)
    b_gi0 = pt["b_ih"][0].at[:2 * H].add(pt["b_hh"][0][:2 * H]).reshape(1, 3 * H)
    b_gh0 = jnp.concatenate([jnp.zeros((2 * H,), f32),
                             pt["b_hh"][0][2 * H:]]).reshape(1, 3 * H)

    # Layers >= 1: fused [input|hidden] weight (2H, 4H) -> [rz_pre | gi_n | gh_n].
    nf = max(L - 1, 1)                                     # dummy slot if L == 1
    w_fused = jnp.zeros((nf, 2 * H, 4 * H), f32)
    b_fused = jnp.zeros((nf, 1, 4 * H), f32)
    for l in range(1, L):
        wi, wh = w_ih_t[l], w_hh_t[l]
        wf = jnp.zeros((2 * H, 4 * H), f32)
        wf = wf.at[:H, :2 * H].set(wi[:, :2 * H])          # input  -> r,z
        wf = wf.at[:H, 2 * H:3 * H].set(wi[:, 2 * H:])     # input  -> n (gi_n)
        wf = wf.at[H:, :2 * H].set(wh[:, :2 * H])          # hidden -> r,z
        wf = wf.at[H:, 3 * H:].set(wh[:, 2 * H:])          # hidden -> n (gh_n)
        w_fused = w_fused.at[l - 1].set(wf)
        bf = jnp.concatenate([pt["b_ih"][l][:2 * H] + pt["b_hh"][l][:2 * H],
                              pt["b_ih"][l][2 * H:], pt["b_hh"][l][2 * H:]])
        b_fused = b_fused.at[l - 1].set(bf.reshape(1, 4 * H))

    return dict(num_layer=L,
                w_ih0=w_ih0, w_hh0=w_hh0, b_gi0=b_gi0, b_gh0=b_gh0,
                w_fused=w_fused.astype(bf16), b_fused=b_fused,
                fc_w=pt["fc_w"].T.astype(bf16), fc_b=pt["fc_b"].reshape(1, H))


# ---------------- pure-JAX reference (mirrors torch.nn.GRU semantics, f32) ----------------

def supervisor_ref(x, pt):
    T, B, H = x.shape
    L = pt["w_ih"].shape[0]
    seq = x
    for l in range(L):
        w_ih, w_hh = pt["w_ih"][l], pt["w_hh"][l]
        b_ih, b_hh = pt["b_ih"][l], pt["b_hh"][l]
        h = jnp.zeros((B, H), jnp.float32)
        outs = []
        for t in range(T):
            gi = seq[t] @ w_ih.T + b_ih
            gh = h @ w_hh.T + b_hh
            i_r, i_z, i_n = jnp.split(gi, 3, axis=-1)
            h_r, h_z, h_n = jnp.split(gh, 3, axis=-1)
            r = jax.nn.sigmoid(i_r + h_r)
            z = jax.nn.sigmoid(i_z + h_z)
            n = jnp.tanh(i_n + r * h_n)
            h = (1.0 - z) * n + z * h
            outs.append(h)
        seq = jnp.stack(outs, axis=0)
    return jax.nn.sigmoid(seq @ pt["fc_w"].T + pt["fc_b"])


if __name__ == "__main__":
    T, B, H, L = 8, 4, 32, 2   # seq_len, batch, hidden_dim, num_layer

    key = jax.random.PRNGKey(0)
    k_x, k_p = jax.random.split(key)
    x = jax.random.normal(k_x, (T, B, H), jnp.float32)

    pt_params = init_params(k_p, H, L)
    kparams = to_kernel_params(pt_params, H, L)

    out = jax.block_until_ready(supervisor_forward(x, kparams))
    ref = jax.block_until_ready(supervisor_ref(x, pt_params))

    assert out.shape == (T, B, H) and out.dtype == jnp.float32
    err = float(jnp.max(jnp.abs(out - ref)))
    # bf16 matmul operands (f32 accumulate) vs. an all-f32 reference -> loosened tolerance.
    assert err < 2e-2, f"max abs err {err}"

    print("KERNEL_OK")
</pallas_src>

<mosaic_0001>
module attributes {stable_mosaic.version = 11 : i64} {
  func.func @_supervisor_kernel(%arg0: memref<64x32xbf16, #tpu.memory_space<vmem>>, %arg1: memref<32x96xbf16, #tpu.memory_space<vmem>>, %arg2: memref<32x96xbf16, #tpu.memory_space<vmem>>, %arg3: memref<1x96xf32, #tpu.memory_space<vmem>>, %arg4: memref<1x96xf32, #tpu.memory_space<vmem>>, %arg5: memref<1x64x128xbf16, #tpu.memory_space<vmem>>, %arg6: memref<1x1x128xf32, #tpu.memory_space<vmem>>, %arg7: memref<32x32xbf16, #tpu.memory_space<vmem>>, %arg8: memref<1x32xf32, #tpu.memory_space<vmem>>, %arg9: memref<64x32xf32, #tpu.memory_space<vmem>>, %arg10: memref<64x96xf32, #tpu.memory_space<vmem>>) attributes {dimension_semantics = [], scalar_prefetch = 0 : i64, scratch_operands = 1 : i64, tpu.core_type = #tpu.core_type<tc>} {
    %c0 = arith.constant 0 : index
    %c0_0 = arith.constant 0 : index
    %0 = vector.load %arg0[%c0, %c0_0] : memref<64x32xbf16, #tpu.memory_space<vmem>>, vector<64x32xbf16>
    %c0_1 = arith.constant 0 : index
    %c0_2 = arith.constant 0 : index
    %1 = vector.load %arg1[%c0_1, %c0_2] : memref<32x96xbf16, #tpu.memory_space<vmem>>, vector<32x96xbf16>
    %cst = arith.constant dense<0.000000e+00> : vector<64x96xf32>
    %2 = tpu.matmul %0, %1, %cst {dimension_numbers = #tpu.dot_dimension_numbers<[1], [0], [0], [1], [0, 0, 1, 1], [], []>} : vector<64x32xbf16>, vector<32x96xbf16>, vector<64x96xf32> -> vector<64x96xf32>
    %c0_3 = arith.constant 0 : index
    %c0_4 = arith.constant 0 : index
    %3 = vector.load %arg3[%c0_3, %c0_4] : memref<1x96xf32, #tpu.memory_space<vmem>>, vector<1x96xf32>
    %4 = vector.broadcast %3 : vector<1x96xf32> to vector<64x96xf32>
    %5 = arith.addf %2, %4 : vector<64x96xf32>
    %c0_5 = arith.constant 0 : index
    %c0_6 = arith.constant 0 : index
    %6 = vector.load %arg10[%c0_5, %c0_6] : memref<64x96xf32, #tpu.memory_space<vmem>>, vector<64x96xf32>
    tpu.vector_store %arg10[%c0_5, %c0_6], %5 {strides = array<i32>} : memref<64x96xf32, #tpu.memory_space<vmem>>, vector<64x96xf32>,
    %c0_7 = arith.constant 0 : index
    %c0_8 = arith.constant 0 : index
    %7 = vector.load %arg2[%c0_7, %c0_8] : memref<32x96xbf16, #tpu.memory_space<vmem>>, vector<32x96xbf16>
    %c0_9 = arith.constant 0 : index
    %c0_10 = arith.constant 0 : index
    %8 = vector.load %arg4[%c0_9, %c0_10] : memref<1x96xf32, #tpu.memory_space<vmem>>, vector<1x96xf32>
    %c0_11 = arith.constant 0 : index
    %c0_12 = arith.constant 0 : index
    %c0_13 = arith.constant 0 : index
    %9 = vector.load %arg5[%c0_11, %c0_12, %c0_13] : memref<1x64x128xbf16, #tpu.memory_space<vmem>>, vector<1x64x128xbf16>
    %10 = vector.shape_cast %9 : vector<1x64x128xbf16> to vector<64x128xbf16>
    %c0_14 = arith.constant 0 : index
    %c0_15 = arith.constant 0 : index
    %c0_16 = arith.constant 0 : index
    %11 = vector.load %arg6[%c0_14, %c0_15, %c0_16] : memref<1x1x128xf32, #tpu.memory_space<vmem>>, vector<1x1x128xf32>
    %12 = vector.shape_cast %11 : vector<1x1x128xf32> to vector<1x128xf32>
    %cst_17 = arith.constant 0.000000e+00 : f32
    %13 = vector.broadcast %cst_17 : f32 to vector<8x32xf32>
    %cst_18 = arith.constant 0.000000e+00 : f32
    %14 = vector.broadcast %cst_18 : f32 to vector<8x32xf32>
    %cst_19 = arith.constant 0.000000e+00 : bf16
    %15 = vector.broadcast %cst_19 : bf16 to vector<8x32xbf16>
    %cst_20 = arith.constant 0.000000e+00 : bf16
    %16 = vector.broadcast %cst_20 : bf16 to vector<8x32xbf16>
    %c0_21 = arith.constant 0 : index
    %c0_22 = arith.constant 0 : index
    %17 = vector.load %arg10[%c0_21, %c0_22] : memref<64x96xf32, #tpu.memory_space<vmem>>, vector<8x96xf32>
    %cst_23 = arith.constant dense<0.000000e+00> : vector<8x96xf32>
    %18 = tpu.matmul %15, %7, %cst_23 {dimension_numbers = #tpu.dot_dimension_numbers<[1], [0], [0], [1], [0, 0, 1, 1], [], []>} : vector<8x32xbf16>, vector<32x96xbf16>, vector<8x96xf32> -> vector<8x96xf32>
    %19 = vector.broadcast %8 : vector<1x96xf32> to vector<8x96xf32>
    %20 = arith.addf %18, %19 : vector<8x96xf32>
    %21 = vector.extract_strided_slice %17 {offsets = [0, 0], sizes = [8, 64], strides = [1, 1]} : vector<8x96xf32> to vector<8x64xf32>
    %22 = vector.extract_strided_slice %20 {offsets = [0, 0], sizes = [8, 64], strides = [1, 1]} : vector<8x96xf32> to vector<8x64xf32>
    %23 = arith.addf %21, %22 : vector<8x64xf32>
    %24 = arith.negf %23 : vector<8x64xf32>
    %25 = math.exp %24 : vector<8x64xf32>
    %cst_24 = arith.constant 1.000000e+00 : f32
    %26 = vector.broadcast %cst_24 : f32 to vector<8x64xf32>
    %27 = arith.addf %26, %25 : vector<8x64xf32>
    %28 = arith.divf %26, %27 : vector<8x64xf32>
    %29 = vector.extract_strided_slice %17 {offsets = [0, 64], sizes = [8, 32], strides = [1, 1]} : vector<8x96xf32> to vector<8x32xf32>
    %30 = vector.extract_strided_slice %28 {offsets = [0, 0], sizes = [8, 32], strides = [1, 1]} : vector<8x64xf32> to vector<8x32xf32>
    %31 = vector.extract_strided_slice %20 {offsets = [0, 64], sizes = [8, 32], strides = [1, 1]} : vector<8x96xf32> to vector<8x32xf32>
    %32 = arith.mulf %30, %31 : vector<8x32xf32>
    %33 = arith.addf %29, %32 : vector<8x32xf32>
    %34 = math.tanh %33 : vector<8x32xf32>
    %35 = vector.extract_strided_slice %28 {offsets = [0, 32], sizes = [8, 32], strides = [1, 1]} : vector<8x64xf32> to vector<8x32xf32>
    %36 = arith.subf %13, %34 : vector<8x32xf32>
    %37 = arith.mulf %35, %36 : vector<8x32xf32>
    %38 = arith.addf %34, %37 : vector<8x32xf32>
    %39 = arith.truncf %38 : vector<8x32xf32> to vector<8x32xbf16>
    %c8 = arith.constant 8 : index
    %c0_25 = arith.constant 0 : index
    %40 = vector.load %arg10[%c8, %c0_25] : memref<64x96xf32, #tpu.memory_space<vmem>>, vector<8x96xf32>
    %cst_26 = arith.constant dense<0.000000e+00> : vector<8x96xf32>
    %41 = tpu.matmul %39, %7, %cst_26 {dimension_numbers = #tpu.dot_dimension_numbers<[1], [0], [0], [1], [0, 0, 1, 1], [], []>} : vector<8x32xbf16>, vector<32x96xbf16>, vector<8x96xf32> -> vector<8x96xf32>
    %42 = vector.broadcast %8 : vector<1x96xf32> to vector<8x96xf32>
    %43 = arith.addf %41, %42 : vector<8x96xf32>
    %44 = vector.extract_strided_slice %40 {offsets = [0, 0], sizes = [8, 64], strides = [1, 1]} : vector<8x96xf32> to vector<8x64xf32>
    %45 = vector.extract_strided_slice %43 {offsets = [0, 0], sizes = [8, 64], strides = [1, 1]} : vector<8x96xf32> to vector<8x64xf32>
    %46 = arith.addf %44, %45 : vector<8x64xf32>
    %47 = arith.negf %46 : vector<8x64xf32>
    %48 = math.exp %47 : vector<8x64xf32>
    %cst_27 = arith.constant 1.000000e+00 : f32
    %49 = vector.broadcast %cst_27 : f32 to vector<8x64xf32>
    %50 = arith.addf %49, %48 : vector<8x64xf32>
    %51 = arith.divf %49, %50 : vector<8x64xf32>
    %52 = vector.extract_strided_slice %40 {offsets = [0, 64], sizes = [8, 32], strides = [1, 1]} : vector<8x96xf32> to vector<8x32xf32>
    %53 = vector.extract_strided_slice %51 {offsets = [0, 0], sizes = [8, 32], strides = [1, 1]} : vector<8x64xf32> to vector<8x32xf32>
    %54 = vector.extract_strided_slice %43 {offsets = [0, 64], sizes = [8, 32], strides = [1, 1]} : vector<8x96xf32> to vector<8x32xf32>
    %55 = arith.mulf %53, %54 : vector<8x32xf32>
    %56 = arith.addf %52, %55 : vector<8x32xf32>
    %57 = math.tanh %56 : vector<8x32xf32>
    %58 = vector.extract_strided_slice %51 {offsets = [0, 32], sizes = [8, 32], strides = [1, 1]} : vector<8x64xf32> to vector<8x32xf32>
    %59 = arith.subf %38, %57 : vector<8x32xf32>
    %60 = arith.mulf %58, %59 : vector<8x32xf32>
    %61 = arith.addf %57, %60 : vector<8x32xf32>
    %62 = arith.truncf %61 : vector<8x32xf32> to vector<8x32xbf16>
    %63 = tpu.concatenate %39, %16 in 1 : vector<8x32xbf16>, vector<8x32xbf16> -> vector<8x64xbf16>
    %cst_28 = arith.constant dense<0.000000e+00> : vector<8x128xf32>
    %64 = tpu.matmul %63, %10, %cst_28 {dimension_numbers = #tpu.dot_dimension_numbers<[1], [0], [0], [1], [0, 0, 1, 1], [], []>} : vector<8x64xbf16>, vector<64x128xbf16>, vector<8x128xf32> -> vector<8x128xf32>
    %65 = vector.broadcast %12 : vector<1x128xf32> to vector<8x128xf32>
    %66 = arith.addf %64, %65 : vector<8x128xf32>
    %67 = vector.extract_strided_slice %66 {offsets = [0, 0], sizes = [8, 64], strides = [1, 1]} : vector<8x128xf32> to vector<8x64xf32>
    %68 = arith.negf %67 : vector<8x64xf32>
    %69 = math.exp %68 : vector<8x64xf32>
    %cst_29 = arith.constant 1.000000e+00 : f32
    %70 = vector.broadcast %cst_29 : f32 to vector<8x64xf32>
    %71 = arith.addf %70, %69 : vector<8x64xf32>
    %72 = arith.divf %70, %71 : vector<8x64xf32>
    %73 = vector.extract_strided_slice %66 {offsets = [0, 64], sizes = [8, 32], strides = [1, 1]} : vector<8x128xf32> to vector<8x32xf32>
    %74 = vector.extract_strided_slice %72 {offsets = [0, 0], sizes = [8, 32], strides = [1, 1]} : vector<8x64xf32> to vector<8x32xf32>
    %75 = vector.extract_strided_slice %66 {offsets = [0, 96], sizes = [8, 32], strides = [1, 1]} : vector<8x128xf32> to vector<8x32xf32>
    %76 = arith.mulf %74, %75 : vector<8x32xf32>
    %77 = arith.addf %73, %76 : vector<8x32xf32>
    %78 = math.tanh %77 : vector<8x32xf32>
    %79 = vector.extract_strided_slice %72 {offsets = [0, 32], sizes = [8, 32], strides = [1, 1]} : vector<8x64xf32> to vector<8x32xf32>
    %80 = arith.subf %14, %78 : vector<8x32xf32>
    %81 = arith.mulf %79, %80 : vector<8x32xf32>
    %82 = arith.addf %78, %81 : vector<8x32xf32>
    %83 = arith.truncf %82 : vector<8x32xf32> to vector<8x32xbf16>
    %c0_30 = arith.constant 0 : index
    %c0_31 = arith.constant 0 : index
    %84 = vector.load %arg9[%c0_30, %c0_31] : memref<64x32xf32, #tpu.memory_space<vmem>>, vector<8x32xf32>
    tpu.vector_store %arg9[%c0_30, %c0_31], %82 {strides = array<i32>} : memref<64x32xf32, #tpu.memory_space<vmem>>, vector<8x32xf32>,
    %c16 = arith.constant 16 : index
    %c0_32 = arith.constant 0 : index
    %85 = vector.load %arg10[%c16, %c0_32] : memref<64x96xf32, #tpu.memory_space<vmem>>, vector<8x96xf32>
    %cst_33 = arith.constant dense<0.000000e+00> : vector<8x96xf32>
    %86 = tpu.matmul %62, %7, %cst_33 {dimension_numbers = #tpu.dot_dimension_numbers<[1], [0], [0], [1], [0, 0, 1, 1], [], []>} : vector<8x32xbf16>, vector<32x96xbf16>, vector<8x96xf32> -> vector<8x96xf32>
    %87 = vector.broadcast %8 : vector<1x96xf32> to vector<8x96xf32>
    %88 = arith.addf %86, %87 : vector<8x96xf32>
    %89 = vector.extract_strided_slice %85 {offsets = [0, 0], sizes = [8, 64], strides = [1, 1]} : vector<8x96xf32> to vector<8x64xf32>
    %90 = vector.extract_strided_slice %88 {offsets = [0, 0], sizes = [8, 64], strides = [1, 1]} : vector<8x96xf32> to vector<8x64xf32>
    %91 = arith.addf %89, %90 : vector<8x64xf32>
    %92 = arith.negf %91 : vector<8x64xf32>
    %93 = math.exp %92 : vector<8x64xf32>
    %cst_34 = arith.constant 1.000000e+00 : f32
    %94 = vector.broadcast %cst_34 : f32 to vector<8x64xf32>
    %95 = arith.addf %94, %93 : vector<8x64xf32>
    %96 = arith.divf %94, %95 : vector<8x64xf32>
    %97 = vector.extract_strided_slice %85 {offsets = [0, 64], sizes = [8, 32], strides = [1, 1]} : vector<8x96xf32> to vector<8x32xf32>
    %98 = vector.extract_strided_slice %96 {offsets = [0, 0], sizes = [8, 32], strides = [1, 1]} : vector<8x64xf32> to vector<8x32xf32>
    %99 = vector.extract_strided_slice %88 {offsets = [0, 64], sizes = [8, 32], strides = [1, 1]} : vector<8x96xf32> to vector<8x32xf32>
    %100 = arith.mulf %98, %99 : vector<8x32xf32>
    %101 = arith.addf %97, %100 : vector<8x32xf32>
    %102 = math.tanh %101 : vector<8x32xf32>
    %103 = vector.extract_strided_slice %96 {offsets = [0, 32], sizes = [8, 32], strides = [1, 1]} : vector<8x64xf32> to vector<8x32xf32>
    %104 = arith.subf %61, %102 : vector<8x32xf32>
    %105 = arith.mulf %103, %104 : vector<8x32xf32>
    %106 = arith.addf %102, %105 : vector<8x32xf32>
    %107 = arith.truncf %106 : vector<8x32xf32> to vector<8x32xbf16>
    %108 = tpu.concatenate %62, %83 in 1 : vector<8x32xbf16>, vector<8x32xbf16> -> vector<8x64xbf16>
    %cst_35 = arith.constant dense<0.000000e+00> : vector<8x128xf32>
    %109 = tpu.matmul %108, %10, %cst_35 {dimension_numbers = #tpu.dot_dimension_numbers<[1], [0], [0], [1], [0, 0, 1, 1], [], []>} : vector<8x64xbf16>, vector<64x128xbf16>, vector<8x128xf32> -> vector<8x128xf32>
    %110 = vector.broadcast %12 : vector<1x128xf32> to vector<8x128xf32>
    %111 = arith.addf %109, %110 : vector<8x128xf32>
    %112 = vector.extract_strided_slice %111 {offsets = [0, 0], sizes = [8, 64], strides = [1, 1]} : vector<8x128xf32> to vector<8x64xf32>
    %113 = arith.negf %112 : vector<8x64xf32>
    %114 = math.exp %113 : vector<8x64xf32>
    %cst_36 = arith.constant 1.000000e+00 : f32
    %115 = vector.broadcast %cst_36 : f32 to vector<8x64xf32>
    %116 = arith.addf %115, %114 : vector<8x64xf32>
    %117 = arith.divf %115, %116 : vector<8x64xf32>
    %118 = vector.extract_strided_slice %111 {offsets = [0, 64], sizes = [8, 32], strides = [1, 1]} : vector<8x128xf32> to vector<8x32xf32>
    %119 = vector.extract_strided_slice %117 {offsets = [0, 0], sizes = [8, 32], strides = [1, 1]} : vector<8x64xf32> to vector<8x32xf32>
    %120 = vector.extract_strided_slice %111 {offsets = [0, 96], sizes = [8, 32], strides = [1, 1]} : vector<8x128xf32> to vector<8x32xf32>
    %121 = arith.mulf %119, %120 : vector<8x32xf32>
    %122 = arith.addf %118, %121 : vector<8x32xf32>
    %123 = math.tanh %122 : vector<8x32xf32>
    %124 = vector.extract_strided_slice %117 {offsets = [0, 32], sizes = [8, 32], strides = [1, 1]} : vector<8x64xf32> to vector<8x32xf32>
    %125 = arith.subf %82, %123 : vector<8x32xf32>
    %126 = arith.mulf %124, %125 : vector<8x32xf32>
    %127 = arith.addf %123, %126 : vector<8x32xf32>
    %128 = arith.truncf %127 : vector<8x32xf32> to vector<8x32xbf16>
    %c8_37 = arith.constant 8 : index
    %c0_38 = arith.constant 0 : index
    %129 = vector.load %arg9[%c8_37, %c0_38] : memref<64x32xf32, #tpu.memory_space<vmem>>, vector<8x32xf32>
    tpu.vector_store %arg9[%c8_37, %c0_38], %127 {strides = array<i32>} : memref<64x32xf32, #tpu.memory_space<vmem>>, vector<8x32xf32>,
    %c24 = arith.constant 24 : index
    %c0_39 = arith.constant 0 : index
    %130 = vector.load %arg10[%c24, %c0_39] : memref<64x96xf32, #tpu.memory_space<vmem>>, vector<8x96xf32>
    %cst_40 = arith.constant dense<0.000000e+00> : vector<8x96xf32>
    %131 = tpu.matmul %107, %7, %cst_40 {dimension_numbers = #tpu.dot_dimension_numbers<[1], [0], [0], [1], [0, 0, 1, 1], [], []>} : vector<8x32xbf16>, vector<32x96xbf16>, vector<8x96xf32> -> vector<8x96xf32>
    %132 = vector.broadcast %8 : vector<1x96xf32> to vector<8x96xf32>
    %133 = arith.addf %131, %132 : vector<8x96xf32>
    %134 = vector.extract_strided_slice %130 {offsets = [0, 0], sizes = [8, 64], strides = [1, 1]} : vector<8x96xf32> to vector<8x64xf32>
    %135 = vector.extract_strided_slice %133 {offsets = [0, 0], sizes = [8, 64], strides = [1, 1]} : vector<8x96xf32> to vector<8x64xf32>
    %136 = arith.addf %134, %135 : vector<8x64xf32>
    %137 = arith.negf %136 : vector<8x64xf32>
    %138 = math.exp %137 : vector<8x64xf32>
    %cst_41 = arith.constant 1.000000e+00 : f32
    %139 = vector.broadcast %cst_41 : f32 to vector<8x64xf32>
    %140 = arith.addf %139, %138 : vector<8x64xf32>
    %141 = arith.divf %139, %140 : vector<8x64xf32>
    %142 = vector.extract_strided_slice %130 {offsets = [0, 64], sizes = [8, 32], strides = [1, 1]} : vector<8x96xf32> to vector<8x32xf32>
    %143 = vector.extract_strided_slice %141 {offsets = [0, 0], sizes = [8, 32], strides = [1, 1]} : vector<8x64xf32> to vector<8x32xf32>
    %144 = vector.extract_strided_slice %133 {offsets = [0, 64], sizes = [8, 32], strides = [1, 1]} : vector<8x96xf32> to vector<8x32xf32>
    %145 = arith.mulf %143, %144 : vector<8x32xf32>
    %146 = arith.addf %142, %145 : vector<8x32xf32>
    %147 = math.tanh %146 : vector<8x32xf32>
    %148 = vector.extract_strided_slice %141 {offsets = [0, 32], sizes = [8, 32], strides = [1, 1]} : vector<8x64xf32> to vector<8x32xf32>
    %149 = arith.subf %106, %147 : vector<8x32xf32>
    %150 = arith.mulf %148, %149 : vector<8x32xf32>
    %151 = arith.addf %147, %150 : vector<8x32xf32>
    %152 = arith.truncf %151 : vector<8x32xf32> to vector<8x32xbf16>
    %153 = tpu.concatenate %107, %128 in 1 : vector<8x32xbf16>, vector<8x32xbf16> -> vector<8x64xbf16>
    %cst_42 = arith.constant dense<0.000000e+00> : vector<8x128xf32>
    %154 = tpu.matmul %153, %10, %cst_42 {dimension_numbers = #tpu.dot_dimension_numbers<[1], [0], [0], [1], [0, 0, 1, 1], [], []>} : vector<8x64xbf16>, vector<64x128xbf16>, vector<8x128xf32> -> vector<8x128xf32>
    %155 = vector.broadcast %12 : vector<1x128xf32> to vector<8x128xf32>
    %156 = arith.addf %154, %155 : vector<8x128xf32>
    %157 = vector.extract_strided_slice %156 {offsets = [0, 0], sizes = [8, 64], strides = [1, 1]} : vector<8x128xf32> to vector<8x64xf32>
    %158 = arith.negf %157 : vector<8x64xf32>
    %159 = math.exp %158 : vector<8x64xf32>
    %cst_43 = arith.constant 1.000000e+00 : f32
    %160 = vector.broadcast %cst_43 : f32 to vector<8x64xf32>
    %161 = arith.addf %160, %159 : vector<8x64xf32>
    %162 = arith.divf %160, %161 : vector<8x64xf32>
    %163 = vector.extract_strided_slice %156 {offsets = [0, 64], sizes = [8, 32], strides = [1, 1]} : vector<8x128xf32> to vector<8x32xf32>
    %164 = vector.extract_strided_slice %162 {offsets = [0, 0], sizes = [8, 32], strides = [1, 1]} : vector<8x64xf32> to vector<8x32xf32>
    %165 = vector.extract_strided_slice %156 {offsets = [0, 96], sizes = [8, 32], strides = [1, 1]} : vector<8x128xf32> to vector<8x32xf32>
    %166 = arith.mulf %164, %165 : vector<8x32xf32>
    %167 = arith.addf %163, %166 : vector<8x32xf32>
    %168 = math.tanh %167 : vector<8x32xf32>
    %169 = vector.extract_strided_slice %162 {offsets = [0, 32], sizes = [8, 32], strides = [1, 1]} : vector<8x64xf32> to vector<8x32xf32>
    %170 = arith.subf %127, %168 : vector<8x32xf32>
    %171 = arith.mulf %169, %170 : vector<8x32xf32>
    %172 = arith.addf %168, %171 : vector<8x32xf32>
    %173 = arith.truncf %172 : vector<8x32xf32> to vector<8x32xbf16>
    %c16_44 = arith.constant 16 : index
    %c0_45 = arith.constant 0 : index
    %174 = vector.load %arg9[%c16_44, %c0_45] : memref<64x32xf32, #tpu.memory_space<vmem>>, vector<8x32xf32>
    tpu.vector_store %arg9[%c16_44, %c0_45], %172 {strides = array<i32>} : memref<64x32xf32, #tpu.memory_space<vmem>>, vector<8x32xf32>,
    %c32 = arith.constant 32 : index
    %c0_46 = arith.constant 0 : index
    %175 = vector.load %arg10[%c32, %c0_46] : memref<64x96xf32, #tpu.memory_space<vmem>>, vector<8x96xf32>
    %cst_47 = arith.constant dense<0.000000e+00> : vector<8x96xf32>
    %176 = tpu.matmul %152, %7, %cst_47 {dimension_numbers = #tpu.dot_dimension_numbers<[1], [0], [0], [1], [0, 0, 1, 1], [], []>} : vector<8x32xbf16>, vector<32x96xbf16>, vector<8x96xf32> -> vector<8x96xf32>
    %177 = vector.broadcast %8 : vector<1x96xf32> to vector<8x96xf32>
    %178 = arith.addf %176, %177 : vector<8x96xf32>
    %179 = vector.extract_strided_slice %175 {offsets = [0, 0], sizes = [8, 64], strides = [1, 1]} : vector<8x96xf32> to vector<8x64xf32>
    %180 = vector.extract_strided_slice %178 {offsets = [0, 0], sizes = [8, 64], strides = [1, 1]} : vector<8x96xf32> to vector<8x64xf32>
    %181 = arith.addf %179, %180 : vector<8x64xf32>
    %182 = arith.negf %181 : vector<8x64xf32>
    %183 = math.exp %182 : vector<8x64xf32>
    %cst_48 = arith.constant 1.000000e+00 : f32
    %184 = vector.broadcast %cst_48 : f32 to vector<8x64xf32>
    %185 = arith.addf %184, %183 : vector<8x64xf32>
    %186 = arith.divf %184, %185 : vector<8x64xf32>
    %187 = vector.extract_strided_slice %175 {offsets = [0, 64], sizes = [8, 32], strides = [1, 1]} : vector<8x96xf32> to vector<8x32xf32>
    %188 = vector.extract_strided_slice %186 {offsets = [0, 0], sizes = [8, 32], strides = [1, 1]} : vector<8x64xf32> to vector<8x32xf32>
    %189 = vector.extract_strided_slice %178 {offsets = [0, 64], sizes = [8, 32], strides = [1, 1]} : vector<8x96xf32> to vector<8x32xf32>
    %190 = arith.mulf %188, %189 : vector<8x32xf32>
    %191 = arith.addf %187, %190 : vector<8x32xf32>
    %192 = math.tanh %191 : vector<8x32xf32>
    %193 = vector.extract_strided_slice %186 {offsets = [0, 32], sizes = [8, 32], strides = [1, 1]} : vector<8x64xf32> to vector<8x32xf32>
    %194 = arith.subf %151, %192 : vector<8x32xf32>
    %195 = arith.mulf %193, %194 : vector<8x32xf32>
    %196 = arith.addf %192, %195 : vector<8x32xf32>
    %197 = arith.truncf %196 : vector<8x32xf32> to vector<8x32xbf16>
    %198 = tpu.concatenate %152, %173 in 1 : vector<8x32xbf16>, vector<8x32xbf16> -> vector<8x64xbf16>
    %cst_49 = arith.constant dense<0.000000e+00> : vector<8x128xf32>
    %199 = tpu.matmul %198, %10, %cst_49 {dimension_numbers = #tpu.dot_dimension_numbers<[1], [0], [0], [1], [0, 0, 1, 1], [], []>} : vector<8x64xbf16>, vector<64x128xbf16>, vector<8x128xf32> -> vector<8x128xf32>
    %200 = vector.broadcast %12 : vector<1x128xf32> to vector<8x128xf32>
    %201 = arith.addf %199, %200 : vector<8x128xf32>
    %202 = vector.extract_strided_slice %201 {offsets = [0, 0], sizes = [8, 64], strides = [1, 1]} : vector<8x128xf32> to vector<8x64xf32>
    %203 = arith.negf %202 : vector<8x64xf32>
    %204 = math.exp %203 : vector<8x64xf32>
    %cst_50 = arith.constant 1.000000e+00 : f32
    %205 = vector.broadcast %cst_50 : f32 to vector<8x64xf32>
    %206 = arith.addf %205, %204 : vector<8x64xf32>
    %207 = arith.divf %205, %206 : vector<8x64xf32>
    %208 = vector.extract_strided_slice %201 {offsets = [0, 64], sizes = [8, 32], strides = [1, 1]} : vector<8x128xf32> to vector<8x32xf32>
    %209 = vector.extract_strided_slice %207 {offsets = [0, 0], sizes = [8, 32], strides = [1, 1]} : vector<8x64xf32> to vector<8x32xf32>
    %210 = vector.extract_strided_slice %201 {offsets = [0, 96], sizes = [8, 32], strides = [1, 1]} : vector<8x128xf32> to vector<8x32xf32>
    %211 = arith.mulf %209, %210 : vector<8x32xf32>
    %212 = arith.addf %208, %211 : vector<8x32xf32>
    %213 = math.tanh %212 : vector<8x32xf32>
    %214 = vector.extract_strided_slice %207 {offsets = [0, 32], sizes = [8, 32], strides = [1, 1]} : vector<8x64xf32> to vector<8x32xf32>
    %215 = arith.subf %172, %213 : vector<8x32xf32>
    %216 = arith.mulf %214, %215 : vector<8x32xf32>
    %217 = arith.addf %213, %216 : vector<8x32xf32>
    %218 = arith.truncf %217 : vector<8x32xf32> to vector<8x32xbf16>
    %c24_51 = arith.constant 24 : index
    %c0_52 = arith.constant 0 : index
    %219 = vector.load %arg9[%c24_51, %c0_52] : memref<64x32xf32, #tpu.memory_space<vmem>>, vector<8x32xf32>
    tpu.vector_store %arg9[%c24_51, %c0_52], %217 {strides = array<i32>} : memref<64x32xf32, #tpu.memory_space<vmem>>, vector<8x32xf32>,
    %c40 = arith.constant 40 : index
    %c0_53 = arith.constant 0 : index
    %220 = vector.load %arg10[%c40, %c0_53] : memref<64x96xf32, #tpu.memory_space<vmem>>, vector<8x96xf32>
    %cst_54 = arith.constant dense<0.000000e+00> : vector<8x96xf32>
    %221 = tpu.matmul %197, %7, %cst_54 {dimension_numbers = #tpu.dot_dimension_numbers<[1], [0], [0], [1], [0, 0, 1, 1], [], []>} : vector<8x32xbf16>, vector<32x96xbf16>, vector<8x96xf32> -> vector<8x96xf32>
    %222 = vector.broadcast %8 : vector<1x96xf32> to vector<8x96xf32>
    %223 = arith.addf %221, %222 : vector<8x96xf32>
    %224 = vector.extract_strided_slice %220 {offsets = [0, 0], sizes = [8, 64], strides = [1, 1]} : vector<8x96xf32> to vector<8x64xf32>
    %225 = vector.extract_strided_slice %223 {offsets = [0, 0], sizes = [8, 64], strides = [1, 1]} : vector<8x96xf32> to vector<8x64xf32>
    %226 = arith.addf %224, %225 : vector<8x64xf32>
    %227 = arith.negf %226 : vector<8x64xf32>
    %228 = math.exp %227 : vector<8x64xf32>
    %cst_55 = arith.constant 1.000000e+00 : f32
    %229 = vector.broadcast %cst_55 : f32 to vector<8x64xf32>
    %230 = arith.addf %229, %228 : vector<8x64xf32>
    %231 = arith.divf %229, %230 : vector<8x64xf32>
    %232 = vector.extract_strided_slice %220 {offsets = [0, 64], sizes = [8, 32], strides = [1, 1]} : vector<8x96xf32> to vector<8x32xf32>
    %233 = vector.extract_strided_slice %231 {offsets = [0, 0], sizes = [8, 32], strides = [1, 1]} : vector<8x64xf32> to vector<8x32xf32>
    %234 = vector.extract_strided_slice %223 {offsets = [0, 64], sizes = [8, 32], strides = [1, 1]} : vector<8x96xf32> to vector<8x32xf32>
    %235 = arith.mulf %233, %234 : vector<8x32xf32>
    %236 = arith.addf %232, %235 : vector<8x32xf32>
    %237 = math.tanh %236 : vector<8x32xf32>
    %238 = vector.extract_strided_slice %231 {offsets = [0, 32], sizes = [8, 32], strides = [1, 1]} : vector<8x64xf32> to vector<8x32xf32>
    %239 = arith.subf %196, %237 : vector<8x32xf32>
    %240 = arith.mulf %238, %239 : vector<8x32xf32>
    %241 = arith.addf %237, %240 : vector<8x32xf32>
    %242 = arith.truncf %241 : vector<8x32xf32> to vector<8x32xbf16>
    %243 = tpu.concatenate %197, %218 in 1 : vector<8x32xbf16>, vector<8x32xbf16> -> vector<8x64xbf16>
    %cst_56 = arith.constant dense<0.000000e+00> : vector<8x128xf32>
    %244 = tpu.matmul %243, %10, %cst_56 {dimension_numbers = #tpu.dot_dimension_numbers<[1], [0], [0], [1], [0, 0, 1, 1], [], []>} : vector<8x64xbf16>, vector<64x128xbf16>, vector<8x128xf32> -> vector<8x128xf32>
    %245 = vector.broadcast %12 : vector<1x128xf32> to vector<8x128xf32>
    %246 = arith.addf %244, %245 : vector<8x128xf32>
    %247 = vector.extract_strided_slice %246 {offsets = [0, 0], sizes = [8, 64], strides = [1, 1]} : vector<8x128xf32> to vector<8x64xf32>
    %248 = arith.negf %247 : vector<8x64xf32>
    %249 = math.exp %248 : vector<8x64xf32>
    %cst_57 = arith.constant 1.000000e+00 : f32
    %250 = vector.broadcast %cst_57 : f32 to vector<8x64xf32>
    %251 = arith.addf %250, %249 : vector<8x64xf32>
    %252 = arith.divf %250, %251 : vector<8x64xf32>
    %253 = vector.extract_strided_slice %246 {offsets = [0, 64], sizes = [8, 32], strides = [1, 1]} : vector<8x128xf32> to vector<8x32xf32>
    %254 = vector.extract_strided_slice %252 {offsets = [0, 0], sizes = [8, 32], strides = [1, 1]} : vector<8x64xf32> to vector<8x32xf32>
    %255 = vector.extract_strided_slice %246 {offsets = [0, 96], sizes = [8, 32], strides = [1, 1]} : vector<8x128xf32> to vector<8x32xf32>
    %256 = arith.mulf %254, %255 : vector<8x32xf32>
    %257 = arith.addf %253, %256 : vector<8x32xf32>
    %258 = math.tanh %257 : vector<8x32xf32>
    %259 = vector.extract_strided_slice %252 {offsets = [0, 32], sizes = [8, 32], strides = [1, 1]} : vector<8x64xf32> to vector<8x32xf32>
    %260 = arith.subf %217, %258 : vector<8x32xf32>
    %261 = arith.mulf %259, %260 : vector<8x32xf32>
    %262 = arith.addf %258, %261 : vector<8x32xf32>
    %263 = arith.truncf %262 : vector<8x32xf32> to vector<8x32xbf16>
    %c32_58 = arith.constant 32 : index
    %c0_59 = arith.constant 0 : index
    %264 = vector.load %arg9[%c32_58, %c0_59] : memref<64x32xf32, #tpu.memory_space<vmem>>, vector<8x32xf32>
    tpu.vector_store %arg9[%c32_58, %c0_59], %262 {strides = array<i32>} : memref<64x32xf32, #tpu.memory_space<vmem>>, vector<8x32xf32>,
    %c48 = arith.constant 48 : index
    %c0_60 = arith.constant 0 : index
    %265 = vector.load %arg10[%c48, %c0_60] : memref<64x96xf32, #tpu.memory_space<vmem>>, vector<8x96xf32>
    %cst_61 = arith.constant dense<0.000000e+00> : vector<8x96xf32>
    %266 = tpu.matmul %242, %7, %cst_61 {dimension_numbers = #tpu.dot_dimension_numbers<[1], [0], [0], [1], [0, 0, 1, 1], [], []>} : vector<8x32xbf16>, vector<32x96xbf16>, vector<8x96xf32> -> vector<8x96xf32>
    %267 = vector.broadcast %8 : vector<1x96xf32> to vector<8x96xf32>
    %268 = arith.addf %266, %267 : vector<8x96xf32>
    %269 = vector.extract_strided_slice %265 {offsets = [0, 0], sizes = [8, 64], strides = [1, 1]} : vector<8x96xf32> to vector<8x64xf32>
    %270 = vector.extract_strided_slice %268 {offsets = [0, 0], sizes = [8, 64], strides = [1, 1]} : vector<8x96xf32> to vector<8x64xf32>
    %271 = arith.addf %269, %270 : vector<8x64xf32>
    %272 = arith.negf %271 : vector<8x64xf32>
    %273 = math.exp %272 : vector<8x64xf32>
    %cst_62 = arith.constant 1.000000e+00 : f32
    %274 = vector.broadcast %cst_62 : f32 to vector<8x64xf32>
    %275 = arith.addf %274, %273 : vector<8x64xf32>
    %276 = arith.divf %274, %275 : vector<8x64xf32>
    %277 = vector.extract_strided_slice %265 {offsets = [0, 64], sizes = [8, 32], strides = [1, 1]} : vector<8x96xf32> to vector<8x32xf32>
    %278 = vector.extract_strided_slice %276 {offsets = [0, 0], sizes = [8, 32], strides = [1, 1]} : vector<8x64xf32> to vector<8x32xf32>
    %279 = vector.extract_strided_slice %268 {offsets = [0, 64], sizes = [8, 32], strides = [1, 1]} : vector<8x96xf32> to vector<8x32xf32>
    %280 = arith.mulf %278, %279 : vector<8x32xf32>
    %281 = arith.addf %277, %280 : vector<8x32xf32>
    %282 = math.tanh %281 : vector<8x32xf32>
    %283 = vector.extract_strided_slice %276 {offsets = [0, 32], sizes = [8, 32], strides = [1, 1]} : vector<8x64xf32> to vector<8x32xf32>
    %284 = arith.subf %241, %282 : vector<8x32xf32>
    %285 = arith.mulf %283, %284 : vector<8x32xf32>
    %286 = arith.addf %282, %285 : vector<8x32xf32>
    %287 = arith.truncf %286 : vector<8x32xf32> to vector<8x32xbf16>
    %288 = tpu.concatenate %242, %263 in 1 : vector<8x32xbf16>, vector<8x32xbf16> -> vector<8x64xbf16>
    %cst_63 = arith.constant dense<0.000000e+00> : vector<8x128xf32>
    %289 = tpu.matmul %288, %10, %cst_63 {dimension_numbers = #tpu.dot_dimension_numbers<[1], [0], [0], [1], [0, 0, 1, 1], [], []>} : vector<8x64xbf16>, vector<64x128xbf16>, vector<8x128xf32> -> vector<8x128xf32>
    %290 = vector.broadcast %12 : vector<1x128xf32> to vector<8x128xf32>
    %291 = arith.addf %289, %290 : vector<8x128xf32>
    %292 = vector.extract_strided_slice %291 {offsets = [0, 0], sizes = [8, 64], strides = [1, 1]} : vector<8x128xf32> to vector<8x64xf32>
    %293 = arith.negf %292 : vector<8x64xf32>
    %294 = math.exp %293 : vector<8x64xf32>
    %cst_64 = arith.constant 1.000000e+00 : f32
    %295 = vector.broadcast %cst_64 : f32 to vector<8x64xf32>
    %296 = arith.addf %295, %294 : vector<8x64xf32>
    %297 = arith.divf %295, %296 : vector<8x64xf32>
    %298 = vector.extract_strided_slice %291 {offsets = [0, 64], sizes = [8, 32], strides = [1, 1]} : vector<8x128xf32> to vector<8x32xf32>
    %299 = vector.extract_strided_slice %297 {offsets = [0, 0], sizes = [8, 32], strides = [1, 1]} : vector<8x64xf32> to vector<8x32xf32>
    %300 = vector.extract_strided_slice %291 {offsets = [0, 96], sizes = [8, 32], strides = [1, 1]} : vector<8x128xf32> to vector<8x32xf32>
    %301 = arith.mulf %299, %300 : vector<8x32xf32>
    %302 = arith.addf %298, %301 : vector<8x32xf32>
    %303 = math.tanh %302 : vector<8x32xf32>
    %304 = vector.extract_strided_slice %297 {offsets = [0, 32], sizes = [8, 32], strides = [1, 1]} : vector<8x64xf32> to vector<8x32xf32>
    %305 = arith.subf %262, %303 : vector<8x32xf32>
    %306 = arith.mulf %304, %305 : vector<8x32xf32>
    %307 = arith.addf %303, %306 : vector<8x32xf32>
    %308 = arith.truncf %307 : vector<8x32xf32> to vector<8x32xbf16>
    %c40_65 = arith.constant 40 : index
    %c0_66 = arith.constant 0 : index
    %309 = vector.load %arg9[%c40_65, %c0_66] : memref<64x32xf32, #tpu.memory_space<vmem>>, vector<8x32xf32>
    tpu.vector_store %arg9[%c40_65, %c0_66], %307 {strides = array<i32>} : memref<64x32xf32, #tpu.memory_space<vmem>>, vector<8x32xf32>,
    %c56 = arith.constant 56 : index
    %c0_67 = arith.constant 0 : index
    %310 = vector.load %arg10[%c56, %c0_67] : memref<64x96xf32, #tpu.memory_space<vmem>>, vector<8x96xf32>
    %cst_68 = arith.constant dense<0.000000e+00> : vector<8x96xf32>
    %311 = tpu.matmul %287, %7, %cst_68 {dimension_numbers = #tpu.dot_dimension_numbers<[1], [0], [0], [1], [0, 0, 1, 1], [], []>} : vector<8x32xbf16>, vector<32x96xbf16>, vector<8x96xf32> -> vector<8x96xf32>
    %312 = vector.broadcast %8 : vector<1x96xf32> to vector<8x96xf32>
    %313 = arith.addf %311, %312 : vector<8x96xf32>
    %314 = vector.extract_strided_slice %310 {offsets = [0, 0], sizes = [8, 64], strides = [1, 1]} : vector<8x96xf32> to vector<8x64xf32>
    %315 = vector.extract_strided_slice %313 {offsets = [0, 0], sizes = [8, 64], strides = [1, 1]} : vector<8x96xf32> to vector<8x64xf32>
    %316 = arith.addf %314, %315 : vector<8x64xf32>
    %317 = arith.negf %316 : vector<8x64xf32>
    %318 = math.exp %317 : vector<8x64xf32>
    %cst_69 = arith.constant 1.000000e+00 : f32
    %319 = vector.broadcast %cst_69 : f32 to vector<8x64xf32>
    %320 = arith.addf %319, %318 : vector<8x64xf32>
    %321 = arith.divf %319, %320 : vector<8x64xf32>
    %322 = vector.extract_strided_slice %310 {offsets = [0, 64], sizes = [8, 32], strides = [1, 1]} : vector<8x96xf32> to vector<8x32xf32>
    %323 = vector.extract_strided_slice %321 {offsets = [0, 0], sizes = [8, 32], strides = [1, 1]} : vector<8x64xf32> to vector<8x32xf32>
    %324 = vector.extract_strided_slice %313 {offsets = [0, 64], sizes = [8, 32], strides = [1, 1]} : vector<8x96xf32> to vector<8x32xf32>
    %325 = arith.mulf %323, %324 : vector<8x32xf32>
    %326 = arith.addf %322, %325 : vector<8x32xf32>
    %327 = math.tanh %326 : vector<8x32xf32>
    %328 = vector.extract_strided_slice %321 {offsets = [0, 32], sizes = [8, 32], strides = [1, 1]} : vector<8x64xf32> to vector<8x32xf32>
    %329 = arith.subf %286, %327 : vector<8x32xf32>
    %330 = arith.mulf %328, %329 : vector<8x32xf32>
    %331 = arith.addf %327, %330 : vector<8x32xf32>
    %332 = arith.truncf %331 : vector<8x32xf32> to vector<8x32xbf16>
    %333 = tpu.concatenate %287, %308 in 1 : vector<8x32xbf16>, vector<8x32xbf16> -> vector<8x64xbf16>
    %cst_70 = arith.constant dense<0.000000e+00> : vector<8x128xf32>
    %334 = tpu.matmul %333, %10, %cst_70 {dimension_numbers = #tpu.dot_dimension_numbers<[1], [0], [0], [1], [0, 0, 1, 1], [], []>} : vector<8x64xbf16>, vector<64x128xbf16>, vector<8x128xf32> -> vector<8x128xf32>
    %335 = vector.broadcast %12 : vector<1x128xf32> to vector<8x128xf32>
    %336 = arith.addf %334, %335 : vector<8x128xf32>
    %337 = vector.extract_strided_slice %336 {offsets = [0, 0], sizes = [8, 64], strides = [1, 1]} : vector<8x128xf32> to vector<8x64xf32>
    %338 = arith.negf %337 : vector<8x64xf32>
    %339 = math.exp %338 : vector<8x64xf32>
    %cst_71 = arith.constant 1.000000e+00 : f32
    %340 = vector.broadcast %cst_71 : f32 to vector<8x64xf32>
    %341 = arith.addf %340, %339 : vector<8x64xf32>
    %342 = arith.divf %340, %341 : vector<8x64xf32>
    %343 = vector.extract_strided_slice %336 {offsets = [0, 64], sizes = [8, 32], strides = [1, 1]} : vector<8x128xf32> to vector<8x32xf32>
    %344 = vector.extract_strided_slice %342 {offsets = [0, 0], sizes = [8, 32], strides = [1, 1]} : vector<8x64xf32> to vector<8x32xf32>
    %345 = vector.extract_strided_slice %336 {offsets = [0, 96], sizes = [8, 32], strides = [1, 1]} : vector<8x128xf32> to vector<8x32xf32>
    %346 = arith.mulf %344, %345 : vector<8x32xf32>
    %347 = arith.addf %343, %346 : vector<8x32xf32>
    %348 = math.tanh %347 : vector<8x32xf32>
    %349 = vector.extract_strided_slice %342 {offsets = [0, 32], sizes = [8, 32], strides = [1, 1]} : vector<8x64xf32> to vector<8x32xf32>
    %350 = arith.subf %307, %348 : vector<8x32xf32>
    %351 = arith.mulf %349, %350 : vector<8x32xf32>
    %352 = arith.addf %348, %351 : vector<8x32xf32>
    %353 = arith.truncf %352 : vector<8x32xf32> to vector<8x32xbf16>
    %c48_72 = arith.constant 48 : index
    %c0_73 = arith.constant 0 : index
    %354 = vector.load %arg9[%c48_72, %c0_73] : memref<64x32xf32, #tpu.memory_space<vmem>>, vector<8x32xf32>
    tpu.vector_store %arg9[%c48_72, %c0_73], %352 {strides = array<i32>} : memref<64x32xf32, #tpu.memory_space<vmem>>, vector<8x32xf32>,
    %355 = tpu.concatenate %332, %353 in 1 : vector<8x32xbf16>, vector<8x32xbf16> -> vector<8x64xbf16>
    %cst_74 = arith.constant dense<0.000000e+00> : vector<8x128xf32>
    %356 = tpu.matmul %355, %10, %cst_74 {dimension_numbers = #tpu.dot_dimension_numbers<[1], [0], [0], [1], [0, 0, 1, 1], [], []>} : vector<8x64xbf16>, vector<64x128xbf16>, vector<8x128xf32> -> vector<8x128xf32>
    %357 = vector.broadcast %12 : vector<1x128xf32> to vector<8x128xf32>
    %358 = arith.addf %356, %357 : vector<8x128xf32>
    %359 = vector.extract_strided_slice %358 {offsets = [0, 0], sizes = [8, 64], strides = [1, 1]} : vector<8x128xf32> to vector<8x64xf32>
    %360 = arith.negf %359 : vector<8x64xf32>
    %361 = math.exp %360 : vector<8x64xf32>
    %cst_75 = arith.constant 1.000000e+00 : f32
    %362 = vector.broadcast %cst_75 : f32 to vector<8x64xf32>
    %363 = arith.addf %362, %361 : vector<8x64xf32>
    %364 = arith.divf %362, %363 : vector<8x64xf32>
    %365 = vector.extract_strided_slice %358 {offsets = [0, 64], sizes = [8, 32], strides = [1, 1]} : vector<8x128xf32> to vector<8x32xf32>
    %366 = vector.extract_strided_slice %364 {offsets = [0, 0], sizes = [8, 32], strides = [1, 1]} : vector<8x64xf32> to vector<8x32xf32>
    %367 = vector.extract_strided_slice %358 {offsets = [0, 96], sizes = [8, 32], strides = [1, 1]} : vector<8x128xf32> to vector<8x32xf32>
    %368 = arith.mulf %366, %367 : vector<8x32xf32>
    %369 = arith.addf %365, %368 : vector<8x32xf32>
    %370 = math.tanh %369 : vector<8x32xf32>
    %371 = vector.extract_strided_slice %364 {offsets = [0, 32], sizes = [8, 32], strides = [1, 1]} : vector<8x64xf32> to vector<8x32xf32>
    %372 = arith.subf %352, %370 : vector<8x32xf32>
    %373 = arith.mulf %371, %372 : vector<8x32xf32>
    %374 = arith.addf %370, %373 : vector<8x32xf32>
    %c56_76 = arith.constant 56 : index
    %c0_77 = arith.constant 0 : index
    %375 = vector.load %arg9[%c56_76, %c0_77] : memref<64x32xf32, #tpu.memory_space<vmem>>, vector<8x32xf32>
    tpu.vector_store %arg9[%c56_76, %c0_77], %374 {strides = array<i32>} : memref<64x32xf32, #tpu.memory_space<vmem>>, vector<8x32xf32>,
    %c0_78 = arith.constant 0 : index
    %c0_79 = arith.constant 0 : index
    %376 = vector.load %arg9[%c0_78, %c0_79] : memref<64x32xf32, #tpu.memory_space<vmem>>, vector<64x32xf32>
    %377 = arith.truncf %376 : vector<64x32xf32> to vector<64x32xbf16>
    %c0_80 = arith.constant 0 : index
    %c0_81 = arith.constant 0 : index
    %378 = vector.load %arg7[%c0_80, %c0_81] : memref<32x32xbf16, #tpu.memory_space<vmem>>, vector<32x32xbf16>
    %cst_82 = arith.constant dense<0.000000e+00> : vector<64x32xf32>
    %379 = tpu.matmul %377, %378, %cst_82 {dimension_numbers = #tpu.dot_dimension_numbers<[1], [0], [0], [1], [0, 0, 1, 1], [], []>} : vector<64x32xbf16>, vector<32x32xbf16>, vector<64x32xf32> -> vector<64x32xf32>
    %c0_83 = arith.constant 0 : index
    %c0_84 = arith.constant 0 : index
    %380 = vector.load %arg8[%c0_83, %c0_84] : memref<1x32xf32, #tpu.memory_space<vmem>>, vector<1x32xf32>
    %381 = vector.broadcast %380 : vector<1x32xf32> to vector<64x32xf32>
    %382 = arith.addf %379, %381 : vector<64x32xf32>
    %383 = arith.negf %382 : vector<64x32xf32>
    %384 = math.exp %383 : vector<64x32xf32>
    %cst_85 = arith.constant 1.000000e+00 : f32
    %385 = vector.broadcast %cst_85 : f32 to vector<64x32xf32>
    %386 = arith.addf %385, %384 : vector<64x32xf32>
    %387 = arith.divf %385, %386 : vector<64x32xf32>
    %c0_86 = arith.constant 0 : index
    %c0_87 = arith.constant 0 : index
    %388 = vector.load %arg9[%c0_86, %c0_87] : memref<64x32xf32, #tpu.memory_space<vmem>>, vector<64x32xf32>
    tpu.vector_store %arg9[%c0_86, %c0_87], %387 {strides = array<i32>} : memref<64x32xf32, #tpu.memory_space<vmem>>, vector<64x32xf32>,
    return
  }
}

</mosaic_0001>

<llo_original>
// kernel: tpu_custom_call.1
$region0: #{tpu_custom_call.1}
  #allocation0 [shape = 'u32[]', space=smem, size = 0x4, offset = 0x4, fixed_abs, tag = 'smem constant byte address 0x4 - core index']
  #allocation1 [shape = 'u32[144,128]{1,0:T(1,128)}', space=vmem, size = 0x12000, scoped, tag = 'internal scratch']
  #allocation2 [shape = 'f32[64,96]{1,0:T(8,128)}', space=vmem, size = 0x8000, scoped, tag = 'scratch operand']
  %s0 = inlined_call_operand.vmem [shape: bf16[64,32], index: 0, kind: input, shape index: {}]
  %s1 = inlined_call_operand.vmem [shape: bf16[32,96], index: 1, kind: input, shape index: {}]
  %s2 = inlined_call_operand.hbm [shape: bf16[32,96], index: 2, kind: input, shape index: {}]
  %s3 = inlined_call_operand.vmem [shape: f32[1,96], index: 3, kind: input, shape index: {}]
  %s4 = inlined_call_operand.vmem [shape: f32[1,96], index: 4, kind: input, shape index: {}]
  %s5 = inlined_call_operand.vmem [shape: bf16[1,64,128], index: 5, kind: input, shape index: {}]
  %s6 = inlined_call_operand.vmem [shape: f32[1,1,128], index: 6, kind: input, shape index: {}]
  %s7 = inlined_call_operand.vmem [shape: bf16[32,32], index: 7, kind: input, shape index: {}]
  %s8 = inlined_call_operand.vmem [shape: f32[1,32], index: 8, kind: input, shape index: {}]
  %s9 = inlined_call_operand.vmem [shape: f32[64,32], index: 9, kind: output, shape index: {}]
  %s10 = sld [smem:[#allocation0]]
  $region50: #{tpu_custom_call.1} parent=0
    _
  %s12 = ssub.s32 1, %s10
  %s13 = scalar_select 0, %s12, %s10
  $region1: #{tpu_custom_call.1} parent=0
    #allocation3 [shape = 'u8[8192]{0}', space=vmem, size = 0x2000, scoped, tag = 'input window, operand 2, single buffered']
    #allocation4 [shape = 's32[1]{0}', space=sflag, size = 0x4, scoped, tag = 'scoped memory for tpu_custom_call.1']
    %14 = vsyncpa [#allocation4], 0
    // Predicated region
    $region2: #{tpu_custom_call.1} parent=1 // pred_check
      _
    $region3: #{tpu_custom_call.1} parent=1 // pred_check_branch
      %16 = sbr.rel (0) target = $region5
    $region4: #{tpu_custom_call.1} parent=1 // pred_region
      _
    $region5: #{tpu_custom_call.1} parent=1 // pred_fallthru
      _
    // Predicated region
    $region6: #{tpu_custom_call.1} parent=1 // pred_check
      _
    $region7: #{tpu_custom_call.1} parent=1 // pred_check_branch
      %18 = sbr.rel (0) target = $region9
    $region8: #{tpu_custom_call.1} parent=1 // pred_region
      _
    $region9: #{tpu_custom_call.1} parent=1 // pred_fallthru
      _
    // Predicated region
    $region10: #{tpu_custom_call.1} parent=1 // pred_check
      _
    $region11: #{tpu_custom_call.1} parent=1 // pred_check_branch
      %20 = sbr.rel (0) target = $region13
    $region12: #{tpu_custom_call.1} parent=1 // pred_region
      %s22 = ssub.s32 256, 256
      %23 = vsyncadd [#allocation4], %s22
      %s24 = sshll.u32 [#allocation3], 4
      %s25 = int_to_ptr.vmem [resolvable:$true] %s24
      %30 = dma.hbm_to_vmem [thread:$0]  %s2, 256, %s25, [#allocation4], 64, 64, 4
    $region13: #{tpu_custom_call.1} parent=1 // pred_fallthru
      _
    // Predicated region
    $region14: #{tpu_custom_call.1} parent=1 // pred_check
      _
    $region15: #{tpu_custom_call.1} parent=1 // pred_check_branch
      %32 = sbr.rel (0) target = $region17
    $region16: #{tpu_custom_call.1} parent=1 // pred_region
      _
    $region17: #{tpu_custom_call.1} parent=1 // pred_fallthru
      _
    // Predicated region
    $region18: #{tpu_custom_call.1} parent=1 // pred_check
      _
    $region19: #{tpu_custom_call.1} parent=1 // pred_check_branch
      %34 = sbr.rel (0) target = $region21
    $region20: #{tpu_custom_call.1} parent=1 // pred_region
      _
    $region21: #{tpu_custom_call.1} parent=1 // pred_fallthru
      _
    // Predicated region
    $region22: #{tpu_custom_call.1} parent=1 // pred_check
      _
    $region23: #{tpu_custom_call.1} parent=1 // pred_check_branch
      %36 = sbr.rel (0) target = $region25
    $region24: #{tpu_custom_call.1} parent=1 // pred_region
      _
    $region25: #{tpu_custom_call.1} parent=1 // pred_fallthru
      _
    // Predicated region
    $region26: #{tpu_custom_call.1} parent=1 // pred_check
      _
    $region27: #{tpu_custom_call.1} parent=1 // pred_check_branch
      %38 = sbr.rel (0) target = $region29
    $region28: #{tpu_custom_call.1} parent=1 // pred_region
      _
    $region29: #{tpu_custom_call.1} parent=1 // pred_fallthru
      _
    // Predicated region
    $region30: #{tpu_custom_call.1} parent=1 // pred_check
      _
    $region31: #{tpu_custom_call.1} parent=1 // pred_check_branch
      %40 = sbr.rel (0) target = $region33
    $region32: #{tpu_custom_call.1} parent=1 // pred_region
      _
    $region33: #{tpu_custom_call.1} parent=1 // pred_fallthru
      _
    // Predicated region
    $region34: #{tpu_custom_call.1} parent=1 // pred_check
      _
    $region35: #{tpu_custom_call.1} parent=1 // pred_check_branch
      %42 = sbr.rel (0) target = $region37
    $region36: #{tpu_custom_call.1} parent=1 // pred_region
      _
    $region37: #{tpu_custom_call.1} parent=1 // pred_fallthru
      _
    // Predicated region
    $region38: #{tpu_custom_call.1} parent=1 // pred_check
      _
    $region39: #{tpu_custom_call.1} parent=1 // pred_check_branch
      %44 = sbr.rel (0) target = $region41
    $region40: #{tpu_custom_call.1} parent=1 // pred_region
      %45 = dma.done [#allocation4], 256
    $region41: #{tpu_custom_call.1} parent=1 // pred_fallthru
      _
    %v47 = vld [vmem:[%s0] sm:$0xf]
    %v48 = vld [vmem:[%s0 + $0x4] sm:$0xf]
    %v49 = vld [vmem:[%s0 + $0x8] sm:$0xf]
    %v50 = vld [vmem:[%s0 + $0xc] sm:$0xf]
    %v51 = vld [vmem:[%s0 + $0x10] sm:$0xf]
    %v52 = vld [vmem:[%s0 + $0x14] sm:$0xf]
    %v53 = vld [vmem:[%s0 + $0x18] sm:$0xf]
    %v54 = vld [vmem:[%s0 + $0x1c] sm:$0xf]
    %v55 = vld [vmem:[%s1] sm:$0xf]
    %v56 = vld [vmem:[%s1 + $0x4] sm:$0xf]
    %v57 = vld [vmem:[%s1 + $0x8] sm:$0xf]
    %v58 = vld [vmem:[%s1 + $0xc] sm:$0xf]
    %v59 = vld [vmem:[%s3] sm:$0x1]
    %v61 = vlaneseq
    %v62 = vshrl.u32 %v61, 7
    %v63 = vsub.s32 0, %v62
    %v64 = vrot.slane %v59, %v63
    %v74 = vunpack.c.l.b16 %v47
    %v75 = vunpack.c.l.b16 %v48
    %v76 = vunpack.c.l.b16 %v49
    %v77 = vunpack.c.l.b16 %v50
    %v78 = vunpack.c.l.b16 %v51
    %v79 = vunpack.c.l.b16 %v52
    %v80 = vunpack.c.l.b16 %v53
    %v81 = vunpack.c.l.b16 %v54
    %v82 = vpack.c.b16 %v75, %v74
    %v83 = vpack.c.b16 %v77, %v76
    %v84 = vpack.c.b16 %v79, %v78
    %v85 = vpack.c.b16 %v81, %v80
    %v90 = vunpack.c.l.b16 %v55
    %v91 = vunpack.c.l.b16 %v56
    %v92 = vunpack.c.l.b16 %v57
    %v93 = vunpack.c.l.b16 %v58
    %v94 = vpack.c.b16 %v91, %v90
    %v95 = vpack.c.b16 %v93, %v92
    %vm98 = vcmask 261120
    %v100 = vsel %vm98, %v82, 0
    %v103 = vsel %vm98, %v83, 0
    %v106 = vsel %vm98, %v84, 0
    %v109 = vsel %vm98, %v85, 0
    %111 = vmatprep.subr.bf16.mxu0 0
    %112 = vmatpush1.bf16.msra.mxu0 %v94
    %113 = vmatprep.subr.bf16.mxu0 0
    %114 = vmatpush1.bf16.msra.mxu0 %v95
    %115 = vmatprep.subr.bf16.mxu0 0
    %116 = vmatpush1.bf16.msra.mxu0 0
    %117 = vmatprep.subr.bf16.mxu0 0
    %118 = vmatpush1.bf16.msra.mxu0 0
    %119 = vmatprep.subr.bf16.mxu0 0
    %120 = vmatpush1.bf16.msra.mxu0 0
    %121 = vmatprep.subr.bf16.mxu0 0
    %122 = vmatpush1.bf16.msra.mxu0 0
    %123 = vmatprep.subr.bf16.mxu0 0
    %124 = vmatpush1.bf16.msra.mxu0 0
    %125 = vmatprep.subr.bf16.mxu0 0
    %126 = vmatpush1.bf16.msra.mxu0 0
    %127 = vmatprep.subr.bf16.mxu0 0
    %128 = vmatpush1.bf16.msra.mxu0 0
    %129 = vmatprep.subr.bf16.mxu0 0
    %130 = vmatpush1.bf16.msra.mxu0 0
    %131 = vmatprep.subr.bf16.mxu0 0
    %132 = vmatpush1.bf16.msra.mxu0 0
    %133 = vmatprep.subr.bf16.mxu0 0
    %134 = vmatpush1.bf16.msra.mxu0 0
    %135 = vmatprep.subr.bf16.mxu0 0
    %136 = vmatpush1.bf16.msra.mxu0 0
    %137 = vmatprep.subr.bf16.mxu0 0
    %138 = vmatpush1.bf16.msra.mxu0 0
    %139 = vmatprep.subr.bf16.mxu0 0
    %140 = vmatpush1.bf16.msra.mxu0 0
    %141 = vmatprep.subr.bf16.mxu0 0
    %142 = vmatpush1.bf16.msra.mxu0 0
    %143 = vmatprep.mubr.bf16.mxu0 0
    %144 = vmatmul.mubr.bf16.gmra.mrb[0].mxu0 %v100
    %v145 = vpop.f32.mrb[0].mxu0
    %v146 = vadd.f32 %v64, %v145
    %v147 = vpop.f32.mrb[0].mxu0
    %v148 = vpop.f32.mrb[0].mxu0
    %v149 = vadd.f32 %v64, %v148
    %v150 = vpop.f32.mrb[0].mxu0
    %151 = vmatprep.mubr.bf16.mxu0 0
    %152 = vmatmul.mubr.bf16.gmra.mrb[0].mxu0 %v103
    %v153 = vpop.f32.mrb[0].mxu0
    %v154 = vadd.f32 %v64, %v153
    %v155 = vpop.f32.mrb[0].mxu0
    %v156 = vpop.f32.mrb[0].mxu0
    %v157 = vadd.f32 %v64, %v156
    %v158 = vpop.f32.mrb[0].mxu0
    %159 = vmatprep.mubr.bf16.mxu0 0
    %160 = vmatmul.mubr.bf16.gmra.mrb[0].mxu0 %v106
    %v161 = vpop.f32.mrb[0].mxu0
    %v162 = vadd.f32 %v64, %v161
    %v163 = vpop.f32.mrb[0].mxu0
    %v164 = vpop.f32.mrb[0].mxu0
    %v165 = vadd.f32 %v64, %v164
    %v166 = vpop.f32.mrb[0].mxu0
    %167 = vmatprep.mubr.bf16.mxu0 0
    %168 = vmatmul.mubr.bf16.gmra.mrb[0].mxu0 %v109
    %v169 = vpop.f32.mrb[0].mxu0
    %v170 = vadd.f32 %v64, %v169
    %v171 = vpop.f32.mrb[0].mxu0
    %v172 = vpop.f32.mrb[0].mxu0
    %v173 = vadd.f32 %v64, %v172
    %v174 = vpop.f32.mrb[0].mxu0
    %175 = vdwg.mxu0
    %vm176 = vcmask 785408
    %177 = vst.msk [vmem:[#allocation2] sm:$0xff] %vm176, %v146
    %178 = vst.msk [vmem:[#allocation2 + $0x8] sm:$0xff] %vm176, %v149
    %179 = vst.msk [vmem:[#allocation2 + $0x10] sm:$0xff] %vm176, %v154
    %180 = vst.msk [vmem:[#allocation2 + $0x18] sm:$0xff] %vm176, %v157
    %181 = vst.msk [vmem:[#allocation2 + $0x20] sm:$0xff] %vm176, %v162
    %182 = vst.msk [vmem:[#allocation2 + $0x28] sm:$0xff] %vm176, %v165
    %183 = vst.msk [vmem:[#allocation2 + $0x30] sm:$0xff] %vm176, %v170
    %184 = vst.msk [vmem:[#allocation2 + $0x38] sm:$0xff] %vm176, %v173
    %v185 = vld [vmem:[#allocation3] sm:$0xf]
    %v186 = vld [vmem:[#allocation3 + $0x4] sm:$0xf]
    %v187 = vld [vmem:[#allocation3 + $0x8] sm:$0xf]
    %v188 = vld [vmem:[#allocation3 + $0xc] sm:$0xf]
    %v189 = vld [vmem:[%s4] sm:$0x1]
    %v190 = vld [vmem:[%s5] sm:$0xf]
    %v191 = vld [vmem:[%s5 + $0x4] sm:$0xf]
    %v192 = vld [vmem:[%s5 + $0x8] sm:$0xf]
    %v193 = vld [vmem:[%s5 + $0xc] sm:$0xf]
    %v194 = vld [vmem:[%s5 + $0x10] sm:$0xf]
    %v195 = vld [vmem:[%s5 + $0x14] sm:$0xf]
    %v196 = vld [vmem:[%s5 + $0x18] sm:$0xf]
    %v197 = vld [vmem:[%s5 + $0x1c] sm:$0xf]
    %v198 = vld [vmem:[%s6] sm:$0x1]
    %v199 = vld [vmem:[#allocation2] sm:$0xff]
    %v201 = vlaneseq
    %v202 = vshrl.u32 %v201, 7
    %v203 = vsub.s32 0, %v202
    %v204 = vrot.slane %v189, %v203
    %v210 = vunpack.c.l.b16 %v185
    %v211 = vunpack.c.l.b16 %v186
    %v212 = vunpack.c.l.b16 %v187
    %v213 = vunpack.c.l.b16 %v188
    %v214 = vpack.c.b16 %v211, %v210
    %v215 = vpack.c.b16 %v213, %v212
    %v219 = vsel %vm98, 0, 0
    %221 = vmatprep.subr.bf16.mxu0 0
    %222 = vmatpush1.bf16.msra.mxu0 %v214
    %223 = vmatprep.subr.bf16.mxu0 0
    %224 = vmatpush1.bf16.msra.mxu0 %v215
    %225 = vmatprep.subr.bf16.mxu0 0
    %226 = vmatpush1.bf16.msra.mxu0 0
    %227 = vmatprep.subr.bf16.mxu0 0
    %228 = vmatpush1.bf16.msra.mxu0 0
    %229 = vmatprep.subr.bf16.mxu0 0
    %230 = vmatpush1.bf16.msra.mxu0 0
    %231 = vmatprep.subr.bf16.mxu0 0
    %232 = vmatpush1.bf16.msra.mxu0 0
    %233 = vmatprep.subr.bf16.mxu0 0
    %234 = vmatpush1.bf16.msra.mxu0 0
    %235 = vmatprep.subr.bf16.mxu0 0
    %236 = vmatpush1.bf16.msra.mxu0 0
    %237 = vmatprep.subr.bf16.mxu0 0
    %238 = vmatpush1.bf16.msra.mxu0 0
    %239 = vmatprep.subr.bf16.mxu0 0
    %240 = vmatpush1.bf16.msra.mxu0 0
    %241 = vmatprep.subr.bf16.mxu0 0
    %242 = vmatpush1.bf16.msra.mxu0 0
    %243 = vmatprep.subr.bf16.mxu0 0
    %244 = vmatpush1.bf16.msra.mxu0 0
    %245 = vmatprep.subr.bf16.mxu0 0
    %246 = vmatpush1.bf16.msra.mxu0 0
    %247 = vmatprep.subr.bf16.mxu0 0
    %248 = vmatpush1.bf16.msra.mxu0 0
    %249 = vmatprep.subr.bf16.mxu0 0
    %250 = vmatpush1.bf16.msra.mxu0 0
    %251 = vmatprep.subr.bf16.mxu0 0
    %252 = vmatpush1.bf16.msra.mxu0 0
    %253 = vmatprep.mubr.bf16.mxu0 0
    %254 = vmatmul.mubr.bf16.gmra.mrb[0].mxu0 %v219
    %v255 = vpop.f32.mrb[0].mxu0
    %v256 = vadd.f32 %v204, %v255
    %v257 = vpop.f32.mrb[0].mxu0
    %v258 = vpop.f32.mrb[0].mxu0
    %v259 = vpop.f32.mrb[0].mxu0
    %260 = vdwg.mxu0
    %v261 = vadd.f32 %v199, %v256
    %v262 = vxor.u32 %v261, 2147483648
    %v263 = vmul.f32 %v262, 1.442695
    %v264 = vpow.pop %v263
    %v265 = vadd.f32 %v264, 1.0
    %v266 = vrcp.pop %v265
    %v267 = vmul.f32 1.0, %v266
    %269 = vrot.lane.b32.xlu0 %v256, 64
    %v270 = vpop.permute.xlu0 %269
    %v272 = vmul.f32 %v267, %v270
    %274 = vrot.lane.b32.xlu0 %v272, 64
    %v275 = vpop.permute.xlu0 %274
    %v277 = vadd.f32 %v199, %v275
    %v278 = vtanh.pop %v277
    %v279 = vsub.f32 0.0, %v278
    %281 = vrot.lane.b32.xlu0 %v279, 96
    %v282 = vpop.permute.xlu0 %281
    %v284 = vmul.f32 %v267, %v282
    %286 = vrot.lane.b32.xlu0 %v284, 32
    %v287 = vpop.permute.xlu0 %286
    %v289 = vadd.f32 %v278, %v287
    %v290 = vpack.c.bf16 %v289, %v289
    %v291 = vld [vmem:[#allocation2 + $0x8] sm:$0xff]
    %293 = vrot.lane.b32.xlu0 %v290, 64
    %v294 = vpop.permute.xlu0 %293
    %v296 = vsel %vm98, %v294, 0
    %298 = vmatprep.subr.bf16.mxu0 0
    %299 = vmatpush1.bf16.msra.mxu0 %v214
    %300 = vmatprep.subr.bf16.mxu0 0
    %301 = vmatpush1.bf16.msra.mxu0 %v215
    %302 = vmatprep.subr.bf16.mxu0 0
    %303 = vmatpush1.bf16.msra.mxu0 0
    %304 = vmatprep.subr.bf16.mxu0 0
    %305 = vmatpush1.bf16.msra.mxu0 0
    %306 = vmatprep.subr.bf16.mxu0 0
    %307 = vmatpush1.bf16.msra.mxu0 0
    %308 = vmatprep.subr.bf16.mxu0 0
    %309 = vmatpush1.bf16.msra.mxu0 0
    %310 = vmatprep.subr.bf16.mxu0 0
    %311 = vmatpush1.bf16.msra.mxu0 0
    %312 = vmatprep.subr.bf16.mxu0 0
    %313 = vmatpush1.bf16.msra.mxu0 0
    %314 = vmatprep.subr.bf16.mxu0 0
    %315 = vmatpush1.bf16.msra.mxu0 0
    %316 = vmatprep.subr.bf16.mxu0 0
    %317 = vmatpush1.bf16.msra.mxu0 0
    %318 = vmatprep.subr.bf16.mxu0 0
    %319 = vmatpush1.bf16.msra.mxu0 0
    %320 = vmatprep.subr.bf16.mxu0 0
    %321 = vmatpush1.bf16.msra.mxu0 0
    %322 = vmatprep.subr.bf16.mxu0 0
    %323 = vmatpush1.bf16.msra.mxu0 0
    %324 = vmatprep.subr.bf16.mxu0 0
    %325 = vmatpush1.bf16.msra.mxu0 0
    %326 = vmatprep.subr.bf16.mxu0 0
    %327 = vmatpush1.bf16.msra.mxu0 0
    %328 = vmatprep.subr.bf16.mxu0 0
    %329 = vmatpush1.bf16.msra.mxu0 0
    %330 = vmatprep.mubr.bf16.mxu0 0
    %331 = vmatmul.mubr.bf16.gmra.mrb[0].mxu0 %v296
    %v332 = vpop.f32.mrb[0].mxu0
    %v333 = vadd.f32 %v204, %v332
    %v334 = vpop.f32.mrb[0].mxu0
    %v335 = vpop.f32.mrb[0].mxu0
    %v336 = vpop.f32.mrb[0].mxu0
    %337 = vdwg.mxu0
    %v338 = vadd.f32 %v291, %v333
    %v339 = vxor.u32 %v338, 2147483648
    %v340 = vmul.f32 %v339, 1.442695
    %v341 = vpow.pop %v340
    %v342 = vadd.f32 %v341, 1.0
    %v343 = vrcp.pop %v342
    %v344 = vmul.f32 1.0, %v343
    %346 = vrot.lane.b32.xlu0 %v333, 64
    %v347 = vpop.permute.xlu0 %346
    %v349 = vmul.f32 %v344, %v347
    %351 = vrot.lane.b32.xlu0 %v349, 64
    %v352 = vpop.permute.xlu0 %351
    %v354 = vadd.f32 %v291, %v352
    %v355 = vtanh.pop %v354
    %v356 = vsub.f32 %v289, %v355
    %358 = vrot.lane.b32.xlu0 %v356, 96
    %v359 = vpop.permute.xlu0 %358
    %v361 = vmul.f32 %v344, %v359
    %363 = vrot.lane.b32.xlu0 %v361, 32
    %v364 = vpop.permute.xlu0 %363
    %v366 = vadd.f32 %v355, %v364
    %v367 = vpack.c.bf16 %v366, %v366
    %v368 = vsel %vm98, %v294, 0
    %v370 = vlaneseq
    %v371 = vshrl.u32 %v370, 7
    %v372 = vsub.s32 0, %v371
    %v373 = vrot.slane %v198, %v372
    %v383 = vunpack.c.l.b16 %v190
    %v384 = vunpack.c.l.b16 %v191
    %v385 = vunpack.c.l.b16 %v192
    %v386 = vunpack.c.l.b16 %v193
    %v387 = vunpack.c.l.b16 %v194
    %v388 = vunpack.c.l.b16 %v195
    %v389 = vunpack.c.l.b16 %v196
    %v390 = vunpack.c.l.b16 %v197
    %v391 = vpack.c.b16 %v384, %v383
    %v392 = vpack.c.b16 %v386, %v385
    %v393 = vpack.c.b16 %v388, %v387
    %v394 = vpack.c.b16 %v390, %v389
    %vm399 = vcmask 523264
    %v400 = vsel %vm399, %v368, 0
    %402 = vmatprep.subr.bf16.mxu0 0
    %403 = vmatpush1.bf16.msra.mxu0 %v391
    %404 = vmatprep.subr.bf16.mxu0 0
    %405 = vmatpush1.bf16.msra.mxu0 %v392
    %406 = vmatprep.subr.bf16.mxu0 0
    %407 = vmatpush1.bf16.msra.mxu0 %v393
    %408 = vmatprep.subr.bf16.mxu0 0
    %409 = vmatpush1.bf16.msra.mxu0 %v394
    %410 = vmatprep.subr.bf16.mxu0 0
    %411 = vmatpush1.bf16.msra.mxu0 0
    %412 = vmatprep.subr.bf16.mxu0 0
    %413 = vmatpush1.bf16.msra.mxu0 0
    %414 = vmatprep.subr.bf16.mxu0 0
    %415 = vmatpush1.bf16.msra.mxu0 0
    %416 = vmatprep.subr.bf16.mxu0 0
    %417 = vmatpush1.bf16.msra.mxu0 0
    %418 = vmatprep.subr.bf16.mxu0 0
    %419 = vmatpush1.bf16.msra.mxu0 0
    %420 = vmatprep.subr.bf16.mxu0 0
    %421 = vmatpush1.bf16.msra.mxu0 0
    %422 = vmatprep.subr.bf16.mxu0 0
    %423 = vmatpush1.bf16.msra.mxu0 0
    %424 = vmatprep.subr.bf16.mxu0 0
    %425 = vmatpush1.bf16.msra.mxu0 0
    %426 = vmatprep.subr.bf16.mxu0 0
    %427 = vmatpush1.bf16.msra.mxu0 0
    %428 = vmatprep.subr.bf16.mxu0 0
    %429 = vmatpush1.bf16.msra.mxu0 0
    %430 = vmatprep.subr.bf16.mxu0 0
    %431 = vmatpush1.bf16.msra.mxu0 0
    %432 = vmatprep.subr.bf16.mxu0 0
    %433 = vmatpush1.bf16.msra.mxu0 0
    %434 = vmatprep.mubr.bf16.mxu0 0
    %435 = vmatmul.mubr.bf16.gmra.mrb[0].mxu0 %v400
    %v436 = vpop.f32.mrb[0].mxu0
    %v437 = vadd.f32 %v373, %v436
    %v438 = vpop.f32.mrb[0].mxu0
    %v439 = vpop.f32.mrb[0].mxu0
    %v440 = vpop.f32.mrb[0].mxu0
    %441 = vdwg.mxu0
    %v442 = vxor.u32 %v437, 2147483648
    %v443 = vmul.f32 %v442, 1.442695
    %v444 = vpow.pop %v443
    %v445 = vadd.f32 %v444, 1.0
    %v446 = vrcp.pop %v445
    %v447 = vmul.f32 1.0, %v446
    %449 = vrot.lane.b32.xlu0 %v437, 32
    %v450 = vpop.permute.xlu0 %449
    %v452 = vmul.f32 %v447, %v450
    %454 = vrot.lane.b32.xlu0 %v452, 64
    %v455 = vpop.permute.xlu0 %454
    %v457 = vadd.f32 %v437, %v455
    %v458 = vtanh.pop %v457
    %v459 = vsub.f32 0.0, %v458
    %461 = vrot.lane.b32.xlu0 %v459, 96
    %v462 = vpop.permute.xlu0 %461
    %v464 = vmul.f32 %v447, %v462
    %466 = vrot.lane.b32.xlu0 %v464, 32
    %v467 = vpop.permute.xlu0 %466
    %v469 = vadd.f32 %v458, %v467
    %v470 = vpack.c.bf16 %v469, %v469
    %472 = vrot.lane.b32.xlu0 %v469, 64
    %v473 = vpop.permute.xlu0 %472
    %475 = vst.msk [vmem:[%s9] sm:$0xff] %vm98, %v473
    %v476 = vld [vmem:[#allocation2 + $0x10] sm:$0xff]
    %478 = vrot.lane.b32.xlu0 %v367, 64
    %v479 = vpop.permute.xlu0 %478
    %v481 = vsel %vm98, %v479, 0
    %483 = vmatprep.subr.bf16.mxu0 0
    %484 = vmatpush1.bf16.msra.mxu0 %v214
    %485 = vmatprep.subr.bf16.mxu0 0
    %486 = vmatpush1.bf16.msra.mxu0 %v215
    %487 = vmatprep.subr.bf16.mxu0 0
    %488 = vmatpush1.bf16.msra.mxu0 0
    %489 = vmatprep.subr.bf16.mxu0 0
    %490 = vmatpush1.bf16.msra.mxu0 0
    %491 = vmatprep.subr.bf16.mxu0 0
    %492 = vmatpush1.bf16.msra.mxu0 0
    %493 = vmatprep.subr.bf16.mxu0 0
    %494 = vmatpush1.bf16.msra.mxu0 0
    %495 = vmatprep.subr.bf16.mxu0 0
    %496 = vmatpush1.bf16.msra.mxu0 0
    %497 = vmatprep.subr.bf16.mxu0 0
    %498 = vmatpush1.bf16.msra.mxu0 0
    %499 = vmatprep.subr.bf16.mxu0 0
    %500 = vmatpush1.bf16.msra.mxu0 0
    %501 = vmatprep.subr.bf16.mxu0 0
    %502 = vmatpush1.bf16.msra.mxu0 0
    %503 = vmatprep.subr.bf16.mxu0 0
    %504 = vmatpush1.bf16.msra.mxu0 0
    %505 = vmatprep.subr.bf16.mxu0 0
    %506 = vmatpush1.bf16.msra.mxu0 0
    %507 = vmatprep.subr.bf16.mxu0 0
    %508 = vmatpush1.bf16.msra.mxu0 0
    %509 = vmatprep.subr.bf16.mxu0 0
    %510 = vmatpush1.bf16.msra.mxu0 0
    %511 = vmatprep.subr.bf16.mxu0 0
    %512 = vmatpush1.bf16.msra.mxu0 0
    %513 = vmatprep.subr.bf16.mxu0 0
    %514 = vmatpush1.bf16.msra.mxu0 0
    %515 = vmatprep.mubr.bf16.mxu0 0
    %516 = vmatmul.mubr.bf16.gmra.mrb[0].mxu0 %v481
    %v517 = vpop.f32.mrb[0].mxu0
    %v518 = vadd.f32 %v204, %v517
    %v519 = vpop.f32.mrb[0].mxu0
    %v520 = vpop.f32.mrb[0].mxu0
    %v521 = vpop.f32.mrb[0].mxu0
    %522 = vdwg.mxu0
    %v523 = vadd.f32 %v476, %v518
    %v524 = vxor.u32 %v523, 2147483648
    %v525 = vmul.f32 %v524, 1.442695
    %v526 = vpow.pop %v525
    %v527 = vadd.f32 %v526, 1.0
    %v528 = vrcp.pop %v527
    %v529 = vmul.f32 1.0, %v528
    %531 = vrot.lane.b32.xlu0 %v518, 64
    %v532 = vpop.permute.xlu0 %531
    %v534 = vmul.f32 %v529, %v532
    %536 = vrot.lane.b32.xlu0 %v534, 64
    %v537 = vpop.permute.xlu0 %536
    %v539 = vadd.f32 %v476, %v537
    %v540 = vtanh.pop %v539
    %v541 = vsub.f32 %v366, %v540
    %543 = vrot.lane.b32.xlu0 %v541, 96
    %v544 = vpop.permute.xlu0 %543
    %v546 = vmul.f32 %v529, %v544
    %548 = vrot.lane.b32.xlu0 %v546, 32
    %v549 = vpop.permute.xlu0 %548
    %v551 = vadd.f32 %v540, %v549
    %v552 = vpack.c.bf16 %v551, %v551
    %554 = vrot.lane.b32.xlu0 %v470, 96
    %v555 = vpop.permute.xlu0 %554
    %v557 = vsel %vm98, %v479, %v555
    %v558 = vsel %vm399, %v557, 0
    %560 = vmatprep.subr.bf16.mxu0 0
    %561 = vmatpush1.bf16.msra.mxu0 %v391
    %562 = vmatprep.subr.bf16.mxu0 0
    %563 = vmatpush1.bf16.msra.mxu0 %v392
    %564 = vmatprep.subr.bf16.mxu0 0
    %565 = vmatpush1.bf16.msra.mxu0 %v393
    %566 = vmatprep.subr.bf16.mxu0 0
    %567 = vmatpush1.bf16.msra.mxu0 %v394
    %568 = vmatprep.subr.bf16.mxu0 0
    %569 = vmatpush1.bf16.msra.mxu0 0
    %570 = vmatprep.subr.bf16.mxu0 0
    %571 = vmatpush1.bf16.msra.mxu0 0
    %572 = vmatprep.subr.bf16.mxu0 0
    %573 = vmatpush1.bf16.msra.mxu0 0
    %574 = vmatprep.subr.bf16.mxu0 0
    %575 = vmatpush1.bf16.msra.mxu0 0
    %576 = vmatprep.subr.bf16.mxu0 0
    %577 = vmatpush1.bf16.msra.mxu0 0
    %578 = vmatprep.subr.bf16.mxu0 0
    %579 = vmatpush1.bf16.msra.mxu0 0
    %580 = vmatprep.subr.bf16.mxu0 0
    %581 = vmatpush1.bf16.msra.mxu0 0
    %582 = vmatprep.subr.bf16.mxu0 0
    %583 = vmatpush1.bf16.msra.mxu0 0
    %584 = vmatprep.subr.bf16.mxu0 0
    %585 = vmatpush1.bf16.msra.mxu0 0
    %586 = vmatprep.subr.bf16.mxu0 0
    %587 = vmatpush1.bf16.msra.mxu0 0
    %588 = vmatprep.subr.bf16.mxu0 0
    %589 = vmatpush1.bf16.msra.mxu0 0
    %590 = vmatprep.subr.bf16.mxu0 0
    %591 = vmatpush1.bf16.msra.mxu0 0
    %592 = vmatprep.mubr.bf16.mxu0 0
    %593 = vmatmul.mubr.bf16.gmra.mrb[0].mxu0 %v558
    %v594 = vpop.f32.mrb[0].mxu0
    %v595 = vadd.f32 %v373, %v594
    %v596 = vpop.f32.mrb[0].mxu0
    %v597 = vpop.f32.mrb[0].mxu0
    %v598 = vpop.f32.mrb[0].mxu0
    %599 = vdwg.mxu0
    %v600 = vxor.u32 %v595, 2147483648
    %v601 = vmul.f32 %v600, 1.442695
    %v602 = vpow.pop %v601
    %v603 = vadd.f32 %v602, 1.0
    %v604 = vrcp.pop %v603
    %v605 = vmul.f32 1.0, %v604
    %607 = vrot.lane.b32.xlu0 %v595, 32
    %v608 = vpop.permute.xlu0 %607
    %v610 = vmul.f32 %v605, %v608
    %612 = vrot.lane.b32.xlu0 %v610, 64
    %v613 = vpop.permute.xlu0 %612
    %v615 = vadd.f32 %v595, %v613
    %v616 = vtanh.pop %v615
    %v617 = vsub.f32 %v469, %v616
    %619 = vrot.lane.b32.xlu0 %v617, 96
    %v620 = vpop.permute.xlu0 %619
    %v622 = vmul.f32 %v605, %v620
    %624 = vrot.lane.b32.xlu0 %v622, 32
    %v625 = vpop.permute.xlu0 %624
    %v627 = vadd.f32 %v616, %v625
    %v628 = vpack.c.bf16 %v627, %v627
    %630 = vrot.lane.b32.xlu0 %v627, 64
    %v631 = vpop.permute.xlu0 %630
    %633 = vst.msk [vmem:[%s9 + $0x8] sm:$0xff] %vm98, %v631
    %v634 = vld [vmem:[#allocation2 + $0x18] sm:$0xff]
    %636 = vrot.lane.b32.xlu0 %v552, 64
    %v637 = vpop.permute.xlu0 %636
    %v639 = vsel %vm98, %v637, 0
    %641 = vmatprep.subr.bf16.mxu0 0
    %642 = vmatpush1.bf16.msra.mxu0 %v214
    %643 = vmatprep.subr.bf16.mxu0 0
    %644 = vmatpush1.bf16.msra.mxu0 %v215
    %645 = vmatprep.subr.bf16.mxu0 0
    %646 = vmatpush1.bf16.msra.mxu0 0
    %647 = vmatprep.subr.bf16.mxu0 0
    %648 = vmatpush1.bf16.msra.mxu0 0
    %649 = vmatprep.subr.bf16.mxu0 0
    %650 = vmatpush1.bf16.msra.mxu0 0
    %651 = vmatprep.subr.bf16.mxu0 0
    %652 = vmatpush1.bf16.msra.mxu0 0
    %653 = vmatprep.subr.bf16.mxu0 0
    %654 = vmatpush1.bf16.msra.mxu0 0
    %655 = vmatprep.subr.bf16.mxu0 0
    %656 = vmatpush1.bf16.msra.mxu0 0
    %657 = vmatprep.subr.bf16.mxu0 0
    %658 = vmatpush1.bf16.msra.mxu0 0
    %659 = vmatprep.subr.bf16.mxu0 0
    %660 = vmatpush1.bf16.msra.mxu0 0
    %661 = vmatprep.subr.bf16.mxu0 0
    %662 = vmatpush1.bf16.msra.mxu0 0
    %663 = vmatprep.subr.bf16.mxu0 0
    %664 = vmatpush1.bf16.msra.mxu0 0
    %665 = vmatprep.subr.bf16.mxu0 0
    %666 = vmatpush1.bf16.msra.mxu0 0
    %667 = vmatprep.subr.bf16.mxu0 0
    %668 = vmatpush1.bf16.msra.mxu0 0
    %669 = vmatprep.subr.bf16.mxu0 0
    %670 = vmatpush1.bf16.msra.mxu0 0
    %671 = vmatprep.subr.bf16.mxu0 0
    %672 = vmatpush1.bf16.msra.mxu0 0
    %673 = vmatprep.mubr.bf16.mxu0 0
    %674 = vmatmul.mubr.bf16.gmra.mrb[0].mxu0 %v639
    %v675 = vpop.f32.mrb[0].mxu0
    %v676 = vadd.f32 %v204, %v675
    %v677 = vpop.f32.mrb[0].mxu0
    %v678 = vpop.f32.mrb[0].mxu0
    %v679 = vpop.f32.mrb[0].mxu0
    %680 = vdwg.mxu0
    %v681 = vadd.f32 %v634, %v676
    %v682 = vxor.u32 %v681, 2147483648
    %v683 = vmul.f32 %v682, 1.442695
    %v684 = vpow.pop %v683
    %v685 = vadd.f32 %v684, 1.0
    %v686 = vrcp.pop %v685
    %v687 = vmul.f32 1.0, %v686
    %689 = vrot.lane.b32.xlu0 %v676, 64
    %v690 = vpop.permute.xlu0 %689
    %v692 = vmul.f32 %v687, %v690
    %694 = vrot.lane.b32.xlu0 %v692, 64
    %v695 = vpop.permute.xlu0 %694
    %v697 = vadd.f32 %v634, %v695
    %v698 = vtanh.pop %v697
    %v699 = vsub.f32 %v551, %v698
    %701 = vrot.lane.b32.xlu0 %v699, 96
    %v702 = vpop.permute.xlu0 %701
    %v704 = vmul.f32 %v687, %v702
    %706 = vrot.lane.b32.xlu0 %v704, 32
    %v707 = vpop.permute.xlu0 %706
    %v709 = vadd.f32 %v698, %v707
    %v710 = vpack.c.bf16 %v709, %v709
    %712 = vrot.lane.b32.xlu0 %v628, 96
    %v713 = vpop.permute.xlu0 %712
    %v715 = vsel %vm98, %v637, %v713
    %v716 = vsel %vm399, %v715, 0
    %718 = vmatprep.subr.bf16.mxu0 0
    %719 = vmatpush1.bf16.msra.mxu0 %v391
    %720 = vmatprep.subr.bf16.mxu0 0
    %721 = vmatpush1.bf16.msra.mxu0 %v392
    %722 = vmatprep.subr.bf16.mxu0 0
    %723 = vmatpush1.bf16.msra.mxu0 %v393
    %724 = vmatprep.subr.bf16.mxu0 0
    %725 = vmatpush1.bf16.msra.mxu0 %v394
    %726 = vmatprep.subr.bf16.mxu0 0
    %727 = vmatpush1.bf16.msra.mxu0 0
    %728 = vmatprep.subr.bf16.mxu0 0
    %729 = vmatpush1.bf16.msra.mxu0 0
    %730 = vmatprep.subr.bf16.mxu0 0
    %731 = vmatpush1.bf16.msra.mxu0 0
    %732 = vmatprep.subr.bf16.mxu0 0
    %733 = vmatpush1.bf16.msra.mxu0 0
    %734 = vmatprep.subr.bf16.mxu0 0
    %735 = vmatpush1.bf16.msra.mxu0 0
    %736 = vmatprep.subr.bf16.mxu0 0
    %737 = vmatpush1.bf16.msra.mxu0 0
    %738 = vmatprep.subr.bf16.mxu0 0
    %739 = vmatpush1.bf16.msra.mxu0 0
    %740 = vmatprep.subr.bf16.mxu0 0
    %741 = vmatpush1.bf16.msra.mxu0 0
    %742 = vmatprep.subr.bf16.mxu0 0
    %743 = vmatpush1.bf16.msra.mxu0 0
    %744 = vmatprep.subr.bf16.mxu0 0
    %745 = vmatpush1.bf16.msra.mxu0 0
    %746 = vmatprep.subr.bf16.mxu0 0
    %747 = vmatpush1.bf16.msra.mxu0 0
    %748 = vmatprep.subr.bf16.mxu0 0
    %749 = vmatpush1.bf16.msra.mxu0 0
    %750 = vmatprep.mubr.bf16.mxu0 0
    %751 = vmatmul.mubr.bf16.gmra.mrb[0].mxu0 %v716
    %v752 = vpop.f32.mrb[0].mxu0
    %v753 = vadd.f32 %v373, %v752
    %v754 = vpop.f32.mrb[0].mxu0
    %v755 = vpop.f32.mrb[0].mxu0
    %v756 = vpop.f32.mrb[0].mxu0
    %757 = vdwg.mxu0
    %v758 = vxor.u32 %v753, 2147483648
    %v759 = vmul.f32 %v758, 1.442695
    %v760 = vpow.pop %v759
    %v761 = vadd.f32 %v760, 1.0
    %v762 = vrcp.pop %v761
    %v763 = vmul.f32 1.0, %v762
    %765 = vrot.lane.b32.xlu0 %v753, 32
    %v766 = vpop.permute.xlu0 %765
    %v768 = vmul.f32 %v763, %v766
    %770 = vrot.lane.b32.xlu0 %v768, 64
    %v771 = vpop.permute.xlu0 %770
    %v773 = vadd.f32 %v753, %v771
    %v774 = vtanh.pop %v773
    %v775 = vsub.f32 %v627, %v774
    %777 = vrot.lane.b32.xlu0 %v775, 96
    %v778 = vpop.permute.xlu0 %777
    %v780 = vmul.f32 %v763, %v778
    %782 = vrot.lane.b32.xlu0 %v780, 32
    %v783 = vpop.permute.xlu0 %782
    %v785 = vadd.f32 %v774, %v783
    %v786 = vpack.c.bf16 %v785, %v785
    %788 = vrot.lane.b32.xlu0 %v785, 64
    %v789 = vpop.permute.xlu0 %788
    %791 = vst.msk [vmem:[%s9 + $0x10] sm:$0xff] %vm98, %v789
    %v792 = vld [vmem:[#allocation2 + $0x20] sm:$0xff]
    %794 = vrot.lane.b32.xlu0 %v710, 64
    %v795 = vpop.permute.xlu0 %794
    %v797 = vsel %vm98, %v795, 0
    %799 = vmatprep.subr.bf16.mxu0 0
    %800 = vmatpush1.bf16.msra.mxu0 %v214
    %801 = vmatprep.subr.bf16.mxu0 0
    %802 = vmatpush1.bf16.msra.mxu0 %v215
    %803 = vmatprep.subr.bf16.mxu0 0
    %804 = vmatpush1.bf16.msra.mxu0 0
    %805 = vmatprep.subr.bf16.mxu0 0
    %806 = vmatpush1.bf16.msra.mxu0 0
    %807 = vmatprep.subr.bf16.mxu0 0
    %808 = vmatpush1.bf16.msra.mxu0 0
    %809 = vmatprep.subr.bf16.mxu0 0
    %810 = vmatpush1.bf16.msra.mxu0 0
    %811 = vmatprep.subr.bf16.mxu0 0
    %812 = vmatpush1.bf16.msra.mxu0 0
    %813 = vmatprep.subr.bf16.mxu0 0
    %814 = vmatpush1.bf16.msra.mxu0 0
    %815 = vmatprep.subr.bf16.mxu0 0
    %816 = vmatpush1.bf16.msra.mxu0 0
    %817 = vmatprep.subr.bf16.mxu0 0
    %818 = vmatpush1.bf16.msra.mxu0 0
    %819 = vmatprep.subr.bf16.mxu0 0
    %820 = vmatpush1.bf16.msra.mxu0 0
    %821 = vmatprep.subr.bf16.mxu0 0
    %822 = vmatpush1.bf16.msra.mxu0 0
    %823 = vmatprep.subr.bf16.mxu0 0
    %824 = vmatpush1.bf16.msra.mxu0 0
    %825 = vmatprep.subr.bf16.mxu0 0
    %826 = vmatpush1.bf16.msra.mxu0 0
    %827 = vmatprep.subr.bf16.mxu0 0
    %828 = vmatpush1.bf16.msra.mxu0 0
    %829 = vmatprep.subr.bf16.mxu0 0
    %830 = vmatpush1.bf16.msra.mxu0 0
    %831 = vmatprep.mubr.bf16.mxu0 0
    %832 = vmatmul.mubr.bf16.gmra.mrb[0].mxu0 %v797
    %v833 = vpop.f32.mrb[0].mxu0
    %v834 = vadd.f32 %v204, %v833
    %v835 = vpop.f32.mrb[0].mxu0
    %v836 = vpop.f32.mrb[0].mxu0
    %v837 = vpop.f32.mrb[0].mxu0
    %838 = vdwg.mxu0
    %v839 = vadd.f32 %v792, %v834
    %v840 = vxor.u32 %v839, 2147483648
    %v841 = vmul.f32 %v840, 1.442695
    %v842 = vpow.pop %v841
    %v843 = vadd.f32 %v842, 1.0
    %v844 = vrcp.pop %v843
    %v845 = vmul.f32 1.0, %v844
    %847 = vrot.lane.b32.xlu0 %v834, 64
    %v848 = vpop.permute.xlu0 %847
    %v850 = vmul.f32 %v845, %v848
    %852 = vrot.lane.b32.xlu0 %v850, 64
    %v853 = vpop.permute.xlu0 %852
    %v855 = vadd.f32 %v792, %v853
    %v856 = vtanh.pop %v855
    %v857 = vsub.f32 %v709, %v856
    %859 = vrot.lane.b32.xlu0 %v857, 96
    %v860 = vpop.permute.xlu0 %859
    %v862 = vmul.f32 %v845, %v860
    %864 = vrot.lane.b32.xlu0 %v862, 32
    %v865 = vpop.permute.xlu0 %864
    %v867 = vadd.f32 %v856, %v865
    %v868 = vpack.c.bf16 %v867, %v867
    %870 = vrot.lane.b32.xlu0 %v786, 96
    %v871 = vpop.permute.xlu0 %870
    %v873 = vsel %vm98, %v795, %v871
    %v874 = vsel %vm399, %v873, 0
    %876 = vmatprep.subr.bf16.mxu0 0
    %877 = vmatpush1.bf16.msra.mxu0 %v391
    %878 = vmatprep.subr.bf16.mxu0 0
    %879 = vmatpush1.bf16.msra.mxu0 %v392
    %880 = vmatprep.subr.bf16.mxu0 0
    %881 = vmatpush1.bf16.msra.mxu0 %v393
    %882 = vmatprep.subr.bf16.mxu0 0
    %883 = vmatpush1.bf16.msra.mxu0 %v394
    %884 = vmatprep.subr.bf16.mxu0 0
    %885 = vmatpush1.bf16.msra.mxu0 0
    %886 = vmatprep.subr.bf16.mxu0 0
    %887 = vmatpush1.bf16.msra.mxu0 0
    %888 = vmatprep.subr.bf16.mxu0 0
    %889 = vmatpush1.bf16.msra.mxu0 0
    %890 = vmatprep.subr.bf16.mxu0 0
    %891 = vmatpush1.bf16.msra.mxu0 0
    %892 = vmatprep.subr.bf16.mxu0 0
    %893 = vmatpush1.bf16.msra.mxu0 0
    %894 = vmatprep.subr.bf16.mxu0 0
    %895 = vmatpush1.bf16.msra.mxu0 0
    %896 = vmatprep.subr.bf16.mxu0 0
    %897 = vmatpush1.bf16.msra.mxu0 0
    %898 = vmatprep.subr.bf16.mxu0 0
    %899 = vmatpush1.bf16.msra.mxu0 0
    %900 = vmatprep.subr.bf16.mxu0 0
    %901 = vmatpush1.bf16.msra.mxu0 0
    %902 = vmatprep.subr.bf16.mxu0 0
    %903 = vmatpush1.bf16.msra.mxu0 0
    %904 = vmatprep.subr.bf16.mxu0 0
    %905 = vmatpush1.bf16.msra.mxu0 0
    %906 = vmatprep.subr.bf16.mxu0 0
    %907 = vmatpush1.bf16.msra.mxu0 0
    %908 = vmatprep.mubr.bf16.mxu0 0
    %909 = vmatmul.mubr.bf16.gmra.mrb[0].mxu0 %v874
    %v910 = vpop.f32.mrb[0].mxu0
    %v911 = vadd.f32 %v373, %v910
    %v912 = vpop.f32.mrb[0].mxu0
    %v913 = vpop.f32.mrb[0].mxu0
    %v914 = vpop.f32.mrb[0].mxu0
    %915 = vdwg.mxu0
    %v916 = vxor.u32 %v911, 2147483648
    %v917 = vmul.f32 %v916, 1.442695
    %v918 = vpow.pop %v917
    %v919 = vadd.f32 %v918, 1.0
    %v920 = vrcp.pop %v919
    %v921 = vmul.f32 1.0, %v920
    %923 = vrot.lane.b32.xlu0 %v911, 32
    %v924 = vpop.permute.xlu0 %923
    %v926 = vmul.f32 %v921, %v924
    %928 = vrot.lane.b32.xlu0 %v926, 64
    %v929 = vpop.permute.xlu0 %928
    %v931 = vadd.f32 %v911, %v929
    %v932 = vtanh.pop %v931
    %v933 = vsub.f32 %v785, %v932
    %935 = vrot.lane.b32.xlu0 %v933, 96
    %v936 = vpop.permute.xlu0 %935
    %v938 = vmul.f32 %v921, %v936
    %940 = vrot.lane.b32.xlu0 %v938, 32
    %v941 = vpop.permute.xlu0 %940
    %v943 = vadd.f32 %v932, %v941
    %v944 = vpack.c.bf16 %v943, %v943
    %946 = vrot.lane.b32.xlu0 %v943, 64
    %v947 = vpop.permute.xlu0 %946
    %949 = vst.msk [vmem:[%s9 + $0x18] sm:$0xff] %vm98, %v947
    %v950 = vld [vmem:[#allocation2 + $0x28] sm:$0xff]
    %952 = vrot.lane.b32.xlu0 %v868, 64
    %v953 = vpop.permute.xlu0 %952
    %v955 = vsel %vm98, %v953, 0
    %957 = vmatprep.subr.bf16.mxu0 0
    %958 = vmatpush1.bf16.msra.mxu0 %v214
    %959 = vmatprep.subr.bf16.mxu0 0
    %960 = vmatpush1.bf16.msra.mxu0 %v215
    %961 = vmatprep.subr.bf16.mxu0 0
    %962 = vmatpush1.bf16.msra.mxu0 0
    %963 = vmatprep.subr.bf16.mxu0 0
    %964 = vmatpush1.bf16.msra.mxu0 0
    %965 = vmatprep.subr.bf16.mxu0 0
    %966 = vmatpush1.bf16.msra.mxu0 0
    %967 = vmatprep.subr.bf16.mxu0 0
    %968 = vmatpush1.bf16.msra.mxu0 0
    %969 = vmatprep.subr.bf16.mxu0 0
    %970 = vmatpush1.bf16.msra.mxu0 0
    %971 = vmatprep.subr.bf16.mxu0 0
    %972 = vmatpush1.bf16.msra.mxu0 0
    %973 = vmatprep.subr.bf16.mxu0 0
    %974 = vmatpush1.bf16.msra.mxu0 0
    %975 = vmatprep.subr.bf16.mxu0 0
    %976 = vmatpush1.bf16.msra.mxu0 0
    %977 = vmatprep.subr.bf16.mxu0 0
    %978 = vmatpush1.bf16.msra.mxu0 0
    %979 = vmatprep.subr.bf16.mxu0 0
    %980 = vmatpush1.bf16.msra.mxu0 0
    %981 = vmatprep.subr.bf16.mxu0 0
    %982 = vmatpush1.bf16.msra.mxu0 0
    %983 = vmatprep.subr.bf16.mxu0 0
    %984 = vmatpush1.bf16.msra.mxu0 0
    %985 = vmatprep.subr.bf16.mxu0 0
    %986 = vmatpush1.bf16.msra.mxu0 0
    %987 = vmatprep.subr.bf16.mxu0 0
    %988 = vmatpush1.bf16.msra.mxu0 0
    %989 = vmatprep.mubr.bf16.mxu0 0
    %990 = vmatmul.mubr.bf16.gmra.mrb[0].mxu0 %v955
    %v991 = vpop.f32.mrb[0].mxu0
    %v992 = vadd.f32 %v204, %v991
    %v993 = vpop.f32.mrb[0].mxu0
    %v994 = vpop.f32.mrb[0].mxu0
    %v995 = vpop.f32.mrb[0].mxu0
    %996 = vdwg.mxu0
    %v997 = vadd.f32 %v950, %v992
    %v998 = vxor.u32 %v997, 2147483648
    %v999 = vmul.f32 %v998, 1.442695
    %v1000 = vpow.pop %v999
    %v1001 = vadd.f32 %v1000, 1.0
    %v1002 = vrcp.pop %v1001
    %v1003 = vmul.f32 1.0, %v1002
    %1005 = vrot.lane.b32.xlu0 %v992, 64
    %v1006 = vpop.permute.xlu0 %1005
    %v1008 = vmul.f32 %v1003, %v1006
    %1010 = vrot.lane.b32.xlu0 %v1008, 64
    %v1011 = vpop.permute.xlu0 %1010
    %v1013 = vadd.f32 %v950, %v1011
    %v1014 = vtanh.pop %v1013
    %v1015 = vsub.f32 %v867, %v1014
    %1017 = vrot.lane.b32.xlu0 %v1015, 96
    %v1018 = vpop.permute.xlu0 %1017
    %v1020 = vmul.f32 %v1003, %v1018
    %1022 = vrot.lane.b32.xlu0 %v1020, 32
    %v1023 = vpop.permute.xlu0 %1022
    %v1025 = vadd.f32 %v1014, %v1023
    %v1026 = vpack.c.bf16 %v1025, %v1025
    %1028 = vrot.lane.b32.xlu0 %v944, 96
    %v1029 = vpop.permute.xlu0 %1028
    %v1031 = vsel %vm98, %v953, %v1029
    %v1032 = vsel %vm399, %v1031, 0
    %1034 = vmatprep.subr.bf16.mxu0 0
    %1035 = vmatpush1.bf16.msra.mxu0 %v391
    %1036 = vmatprep.subr.bf16.mxu0 0
    %1037 = vmatpush1.bf16.msra.mxu0 %v392
    %1038 = vmatprep.subr.bf16.mxu0 0
    %1039 = vmatpush1.bf16.msra.mxu0 %v393
    %1040 = vmatprep.subr.bf16.mxu0 0
    %1041 = vmatpush1.bf16.msra.mxu0 %v394
    %1042 = vmatprep.subr.bf16.mxu0 0
    %1043 = vmatpush1.bf16.msra.mxu0 0
    %1044 = vmatprep.subr.bf16.mxu0 0
    %1045 = vmatpush1.bf16.msra.mxu0 0
    %1046 = vmatprep.subr.bf16.mxu0 0
    %1047 = vmatpush1.bf16.msra.mxu0 0
    %1048 = vmatprep.subr.bf16.mxu0 0
    %1049 = vmatpush1.bf16.msra.mxu0 0
    %1050 = vmatprep.subr.bf16.mxu0 0
    %1051 = vmatpush1.bf16.msra.mxu0 0
    %1052 = vmatprep.subr.bf16.mxu0 0
    %1053 = vmatpush1.bf16.msra.mxu0 0
    %1054 = vmatprep.subr.bf16.mxu0 0
    %1055 = vmatpush1.bf16.msra.mxu0 0
    %1056 = vmatprep.subr.bf16.mxu0 0
    %1057 = vmatpush1.bf16.msra.mxu0 0
    %1058 = vmatprep.subr.bf16.mxu0 0
    %1059 = vmatpush1.bf16.msra.mxu0 0
    %1060 = vmatprep.subr.bf16.mxu0 0
    %1061 = vmatpush1.bf16.msra.mxu0 0
    %1062 = vmatprep.subr.bf16.mxu0 0
    %1063 = vmatpush1.bf16.msra.mxu0 0
    %1064 = vmatprep.subr.bf16.mxu0 0
    %1065 = vmatpush1.bf16.msra.mxu0 0
    %1066 = vmatprep.mubr.bf16.mxu0 0
    %1067 = vmatmul.mubr.bf16.gmra.mrb[0].mxu0 %v1032
    %v1068 = vpop.f32.mrb[0].mxu0
    %v1069 = vadd.f32 %v373, %v1068
    %v1070 = vpop.f32.mrb[0].mxu0
    %v1071 = vpop.f32.mrb[0].mxu0
    %v1072 = vpop.f32.mrb[0].mxu0
    %1073 = vdwg.mxu0
    %v1074 = vxor.u32 %v1069, 2147483648
    %v1075 = vmul.f32 %v1074, 1.442695
    %v1076 = vpow.pop %v1075
    %v1077 = vadd.f32 %v1076, 1.0
    %v1078 = vrcp.pop %v1077
    %v1079 = vmul.f32 1.0, %v1078
    %1081 = vrot.lane.b32.xlu0 %v1069, 32
    %v1082 = vpop.permute.xlu0 %1081
    %v1084 = vmul.f32 %v1079, %v1082
    %1086 = vrot.lane.b32.xlu0 %v1084, 64
    %v1087 = vpop.permute.xlu0 %1086
    %v1089 = vadd.f32 %v1069, %v1087
    %v1090 = vtanh.pop %v1089
    %v1091 = vsub.f32 %v943, %v1090
    %1093 = vrot.lane.b32.xlu0 %v1091, 96
    %v1094 = vpop.permute.xlu0 %1093
    %v1096 = vmul.f32 %v1079, %v1094
    %1098 = vrot.lane.b32.xlu0 %v1096, 32
    %v1099 = vpop.permute.xlu0 %1098
    %v1101 = vadd.f32 %v1090, %v1099
    %v1102 = vpack.c.bf16 %v1101, %v1101
    %1104 = vrot.lane.b32.xlu0 %v1101, 64
    %v1105 = vpop.permute.xlu0 %1104
    %1107 = vst.msk [vmem:[%s9 + $0x20] sm:$0xff] %vm98, %v1105
    %v1108 = vld [vmem:[#allocation2 + $0x30] sm:$0xff]
    %1110 = vrot.lane.b32.xlu0 %v1026, 64
    %v1111 = vpop.permute.xlu0 %1110
    %v1113 = vsel %vm98, %v1111, 0
    %1115 = vmatprep.subr.bf16.mxu0 0
    %1116 = vmatpush1.bf16.msra.mxu0 %v214
    %1117 = vmatprep.subr.bf16.mxu0 0
    %1118 = vmatpush1.bf16.msra.mxu0 %v215
    %1119 = vmatprep.subr.bf16.mxu0 0
    %1120 = vmatpush1.bf16.msra.mxu0 0
    %1121 = vmatprep.subr.bf16.mxu0 0
    %1122 = vmatpush1.bf16.msra.mxu0 0
    %1123 = vmatprep.subr.bf16.mxu0 0
    %1124 = vmatpush1.bf16.msra.mxu0 0
    %1125 = vmatprep.subr.bf16.mxu0 0
    %1126 = vmatpush1.bf16.msra.mxu0 0
    %1127 = vmatprep.subr.bf16.mxu0 0
    %1128 = vmatpush1.bf16.msra.mxu0 0
    %1129 = vmatprep.subr.bf16.mxu0 0
    %1130 = vmatpush1.bf16.msra.mxu0 0
    %1131 = vmatprep.subr.bf16.mxu0 0
    %1132 = vmatpush1.bf16.msra.mxu0 0
    %1133 = vmatprep.subr.bf16.mxu0 0
    %1134 = vmatpush1.bf16.msra.mxu0 0
    %1135 = vmatprep.subr.bf16.mxu0 0
    %1136 = vmatpush1.bf16.msra.mxu0 0
    %1137 = vmatprep.subr.bf16.mxu0 0
    %1138 = vmatpush1.bf16.msra.mxu0 0
    %1139 = vmatprep.subr.bf16.mxu0 0
    %1140 = vmatpush1.bf16.msra.mxu0 0
    %1141 = vmatprep.subr.bf16.mxu0 0
    %1142 = vmatpush1.bf16.msra.mxu0 0
    %1143 = vmatprep.subr.bf16.mxu0 0
    %1144 = vmatpush1.bf16.msra.mxu0 0
    %1145 = vmatprep.subr.bf16.mxu0 0
    %1146 = vmatpush1.bf16.msra.mxu0 0
    %1147 = vmatprep.mubr.bf16.mxu0 0
    %1148 = vmatmul.mubr.bf16.gmra.mrb[0].mxu0 %v1113
    %v1149 = vpop.f32.mrb[0].mxu0
    %v1150 = vadd.f32 %v204, %v1149
    %v1151 = vpop.f32.mrb[0].mxu0
    %v1152 = vpop.f32.mrb[0].mxu0
    %v1153 = vpop.f32.mrb[0].mxu0
    %1154 = vdwg.mxu0
    %v1155 = vadd.f32 %v1108, %v1150
    %v1156 = vxor.u32 %v1155, 2147483648
    %v1157 = vmul.f32 %v1156, 1.442695
    %v1158 = vpow.pop %v1157
    %v1159 = vadd.f32 %v1158, 1.0
    %v1160 = vrcp.pop %v1159
    %v1161 = vmul.f32 1.0, %v1160
    %1163 = vrot.lane.b32.xlu0 %v1150, 64
    %v1164 = vpop.permute.xlu0 %1163
    %v1166 = vmul.f32 %v1161, %v1164
    %1168 = vrot.lane.b32.xlu0 %v1166, 64
    %v1169 = vpop.permute.xlu0 %1168
    %v1171 = vadd.f32 %v1108, %v1169
    %v1172 = vtanh.pop %v1171
    %v1173 = vsub.f32 %v1025, %v1172
    %1175 = vrot.lane.b32.xlu0 %v1173, 96
    %v1176 = vpop.permute.xlu0 %1175
    %v1178 = vmul.f32 %v1161, %v1176
    %1180 = vrot.lane.b32.xlu0 %v1178, 32
    %v1181 = vpop.permute.xlu0 %1180
    %v1183 = vadd.f32 %v1172, %v1181
    %v1184 = vpack.c.bf16 %v1183, %v1183
    %1186 = vrot.lane.b32.xlu0 %v1102, 96
    %v1187 = vpop.permute.xlu0 %1186
    %v1189 = vsel %vm98, %v1111, %v1187
    %v1190 = vsel %vm399, %v1189, 0
    %1192 = vmatprep.subr.bf16.mxu0 0
    %1193 = vmatpush1.bf16.msra.mxu0 %v391
    %1194 = vmatprep.subr.bf16.mxu0 0
    %1195 = vmatpush1.bf16.msra.mxu0 %v392
    %1196 = vmatprep.subr.bf16.mxu0 0
    %1197 = vmatpush1.bf16.msra.mxu0 %v393
    %1198 = vmatprep.subr.bf16.mxu0 0
    %1199 = vmatpush1.bf16.msra.mxu0 %v394
    %1200 = vmatprep.subr.bf16.mxu0 0
    %1201 = vmatpush1.bf16.msra.mxu0 0
    %1202 = vmatprep.subr.bf16.mxu0 0
    %1203 = vmatpush1.bf16.msra.mxu0 0
    %1204 = vmatprep.subr.bf16.mxu0 0
    %1205 = vmatpush1.bf16.msra.mxu0 0
    %1206 = vmatprep.subr.bf16.mxu0 0
    %1207 = vmatpush1.bf16.msra.mxu0 0
    %1208 = vmatprep.subr.bf16.mxu0 0
    %1209 = vmatpush1.bf16.msra.mxu0 0
    %1210 = vmatprep.subr.bf16.mxu0 0
    %1211 = vmatpush1.bf16.msra.mxu0 0
    %1212 = vmatprep.subr.bf16.mxu0 0
    %1213 = vmatpush1.bf16.msra.mxu0 0
    %1214 = vmatprep.subr.bf16.mxu0 0
    %1215 = vmatpush1.bf16.msra.mxu0 0
    %1216 = vmatprep.subr.bf16.mxu0 0
    %1217 = vmatpush1.bf16.msra.mxu0 0
    %1218 = vmatprep.subr.bf16.mxu0 0
    %1219 = vmatpush1.bf16.msra.mxu0 0
    %1220 = vmatprep.subr.bf16.mxu0 0
    %1221 = vmatpush1.bf16.msra.mxu0 0
    %1222 = vmatprep.subr.bf16.mxu0 0
    %1223 = vmatpush1.bf16.msra.mxu0 0
    %1224 = vmatprep.mubr.bf16.mxu0 0
    %1225 = vmatmul.mubr.bf16.gmra.mrb[0].mxu0 %v1190
    %v1226 = vpop.f32.mrb[0].mxu0
    %v1227 = vadd.f32 %v373, %v1226
    %v1228 = vpop.f32.mrb[0].mxu0
    %v1229 = vpop.f32.mrb[0].mxu0
    %v1230 = vpop.f32.mrb[0].mxu0
    %1231 = vdwg.mxu0
    %v1232 = vxor.u32 %v1227, 2147483648
    %v1233 = vmul.f32 %v1232, 1.442695
    %v1234 = vpow.pop %v1233
    %v1235 = vadd.f32 %v1234, 1.0
    %v1236 = vrcp.pop %v1235
    %v1237 = vmul.f32 1.0, %v1236
    %1239 = vrot.lane.b32.xlu0 %v1227, 32
    %v1240 = vpop.permute.xlu0 %1239
    %v1242 = vmul.f32 %v1237, %v1240
    %1244 = vrot.lane.b32.xlu0 %v1242, 64
    %v1245 = vpop.permute.xlu0 %1244
    %v1247 = vadd.f32 %v1227, %v1245
    %v1248 = vtanh.pop %v1247
    %v1249 = vsub.f32 %v1101, %v1248
    %1251 = vrot.lane.b32.xlu0 %v1249, 96
    %v1252 = vpop.permute.xlu0 %1251
    %v1254 = vmul.f32 %v1237, %v1252
    %1256 = vrot.lane.b32.xlu0 %v1254, 32
    %v1257 = vpop.permute.xlu0 %1256
    %v1259 = vadd.f32 %v1248, %v1257
    %v1260 = vpack.c.bf16 %v1259, %v1259
    %1262 = vrot.lane.b32.xlu0 %v1259, 64
    %v1263 = vpop.permute.xlu0 %1262
    %1265 = vst.msk [vmem:[%s9 + $0x28] sm:$0xff] %vm98, %v1263
    %v1266 = vld [vmem:[#allocation2 + $0x38] sm:$0xff]
    %1268 = vrot.lane.b32.xlu0 %v1184, 64
    %v1269 = vpop.permute.xlu0 %1268
    %v1271 = vsel %vm98, %v1269, 0
    %1273 = vmatprep.subr.bf16.mxu0 0
    %1274 = vmatpush1.bf16.msra.mxu0 %v214
    %1275 = vmatprep.subr.bf16.mxu0 0
    %1276 = vmatpush1.bf16.msra.mxu0 %v215
    %1277 = vmatprep.subr.bf16.mxu0 0
    %1278 = vmatpush1.bf16.msra.mxu0 0
    %1279 = vmatprep.subr.bf16.mxu0 0
    %1280 = vmatpush1.bf16.msra.mxu0 0
    %1281 = vmatprep.subr.bf16.mxu0 0
    %1282 = vmatpush1.bf16.msra.mxu0 0
    %1283 = vmatprep.subr.bf16.mxu0 0
    %1284 = vmatpush1.bf16.msra.mxu0 0
    %1285 = vmatprep.subr.bf16.mxu0 0
    %1286 = vmatpush1.bf16.msra.mxu0 0
    %1287 = vmatprep.subr.bf16.mxu0 0
    %1288 = vmatpush1.bf16.msra.mxu0 0
    %1289 = vmatprep.subr.bf16.mxu0 0
    %1290 = vmatpush1.bf16.msra.mxu0 0
    %1291 = vmatprep.subr.bf16.mxu0 0
    %1292 = vmatpush1.bf16.msra.mxu0 0
    %1293 = vmatprep.subr.bf16.mxu0 0
    %1294 = vmatpush1.bf16.msra.mxu0 0
    %1295 = vmatprep.subr.bf16.mxu0 0
    %1296 = vmatpush1.bf16.msra.mxu0 0
    %1297 = vmatprep.subr.bf16.mxu0 0
    %1298 = vmatpush1.bf16.msra.mxu0 0
    %1299 = vmatprep.subr.bf16.mxu0 0
    %1300 = vmatpush1.bf16.msra.mxu0 0
    %1301 = vmatprep.subr.bf16.mxu0 0
    %1302 = vmatpush1.bf16.msra.mxu0 0
    %1303 = vmatprep.subr.bf16.mxu0 0
    %1304 = vmatpush1.bf16.msra.mxu0 0
    %1305 = vmatprep.mubr.bf16.mxu0 0
    %1306 = vmatmul.mubr.bf16.gmra.mrb[0].mxu0 %v1271
    %v1307 = vpop.f32.mrb[0].mxu0
    %v1308 = vadd.f32 %v204, %v1307
    %v1309 = vpop.f32.mrb[0].mxu0
    %v1310 = vpop.f32.mrb[0].mxu0
    %v1311 = vpop.f32.mrb[0].mxu0
    %1312 = vdwg.mxu0
    %v1313 = vadd.f32 %v1266, %v1308
    %v1314 = vxor.u32 %v1313, 2147483648
    %v1315 = vmul.f32 %v1314, 1.442695
    %v1316 = vpow.pop %v1315
    %v1317 = vadd.f32 %v1316, 1.0
    %v1318 = vrcp.pop %v1317
    %v1319 = vmul.f32 1.0, %v1318
    %1321 = vrot.lane.b32.xlu0 %v1308, 64
    %v1322 = vpop.permute.xlu0 %1321
    %v1324 = vmul.f32 %v1319, %v1322
    %1326 = vrot.lane.b32.xlu0 %v1324, 64
    %v1327 = vpop.permute.xlu0 %1326
    %v1329 = vadd.f32 %v1266, %v1327
    %v1330 = vtanh.pop %v1329
    %v1331 = vsub.f32 %v1183, %v1330
    %1333 = vrot.lane.b32.xlu0 %v1331, 96
    %v1334 = vpop.permute.xlu0 %1333
    %v1336 = vmul.f32 %v1319, %v1334
    %1338 = vrot.lane.b32.xlu0 %v1336, 32
    %v1339 = vpop.permute.xlu0 %1338
    %v1341 = vadd.f32 %v1330, %v1339
    %v1342 = vpack.c.bf16 %v1341, %v1341
    %1344 = vrot.lane.b32.xlu0 %v1260, 96
    %v1345 = vpop.permute.xlu0 %1344
    %v1347 = vsel %vm98, %v1269, %v1345
    %v1348 = vsel %vm399, %v1347, 0
    %1350 = vmatprep.subr.bf16.mxu0 0
    %1351 = vmatpush1.bf16.msra.mxu0 %v391
    %1352 = vmatprep.subr.bf16.mxu0 0
    %1353 = vmatpush1.bf16.msra.mxu0 %v392
    %1354 = vmatprep.subr.bf16.mxu0 0
    %1355 = vmatpush1.bf16.msra.mxu0 %v393
    %1356 = vmatprep.subr.bf16.mxu0 0
    %1357 = vmatpush1.bf16.msra.mxu0 %v394
    %1358 = vmatprep.subr.bf16.mxu0 0
    %1359 = vmatpush1.bf16.msra.mxu0 0
    %1360 = vmatprep.subr.bf16.mxu0 0
    %1361 = vmatpush1.bf16.msra.mxu0 0
    %1362 = vmatprep.subr.bf16.mxu0 0
    %1363 = vmatpush1.bf16.msra.mxu0 0
    %1364 = vmatprep.subr.bf16.mxu0 0
    %1365 = vmatpush1.bf16.msra.mxu0 0
    %1366 = vmatprep.subr.bf16.mxu0 0
    %1367 = vmatpush1.bf16.msra.mxu0 0
    %1368 = vmatprep.subr.bf16.mxu0 0
    %1369 = vmatpush1.bf16.msra.mxu0 0
    %1370 = vmatprep.subr.bf16.mxu0 0
    %1371 = vmatpush1.bf16.msra.mxu0 0
    %1372 = vmatprep.subr.bf16.mxu0 0
    %1373 = vmatpush1.bf16.msra.mxu0 0
    %1374 = vmatprep.subr.bf16.mxu0 0
    %1375 = vmatpush1.bf16.msra.mxu0 0
    %1376 = vmatprep.subr.bf16.mxu0 0
    %1377 = vmatpush1.bf16.msra.mxu0 0
    %1378 = vmatprep.subr.bf16.mxu0 0
    %1379 = vmatpush1.bf16.msra.mxu0 0
    %1380 = vmatprep.subr.bf16.mxu0 0
    %1381 = vmatpush1.bf16.msra.mxu0 0
    %1382 = vmatprep.mubr.bf16.mxu0 0
    %1383 = vmatmul.mubr.bf16.gmra.mrb[0].mxu0 %v1348
    %v1384 = vpop.f32.mrb[0].mxu0
    %v1385 = vadd.f32 %v373, %v1384
    %v1386 = vpop.f32.mrb[0].mxu0
    %v1387 = vpop.f32.mrb[0].mxu0
    %v1388 = vpop.f32.mrb[0].mxu0
    %1389 = vdwg.mxu0
    %v1390 = vxor.u32 %v1385, 2147483648
    %v1391 = vmul.f32 %v1390, 1.442695
    %v1392 = vpow.pop %v1391
    %v1393 = vadd.f32 %v1392, 1.0
    %v1394 = vrcp.pop %v1393
    %v1395 = vmul.f32 1.0, %v1394
    %1397 = vrot.lane.b32.xlu0 %v1385, 32
    %v1398 = vpop.permute.xlu0 %1397
    %v1400 = vmul.f32 %v1395, %v1398
    %1402 = vrot.lane.b32.xlu0 %v1400, 64
    %v1403 = vpop.permute.xlu0 %1402
    %v1405 = vadd.f32 %v1385, %v1403
    %v1406 = vtanh.pop %v1405
    %v1407 = vsub.f32 %v1259, %v1406
    %1409 = vrot.lane.b32.xlu0 %v1407, 96
    %v1410 = vpop.permute.xlu0 %1409
    %v1412 = vmul.f32 %v1395, %v1410
    %1414 = vrot.lane.b32.xlu0 %v1412, 32
    %v1415 = vpop.permute.xlu0 %1414
    %v1417 = vadd.f32 %v1406, %v1415
    %v1418 = vpack.c.bf16 %v1417, %v1417
    %1420 = vrot.lane.b32.xlu0 %v1417, 64
    %v1421 = vpop.permute.xlu0 %1420
    %1423 = vst.msk [vmem:[%s9 + $0x30] sm:$0xff] %vm98, %v1421
    %1425 = vrot.lane.b32.xlu0 %v1342, 64
    %v1426 = vpop.permute.xlu0 %1425
    %1428 = vrot.lane.b32.xlu0 %v1418, 96
    %v1429 = vpop.permute.xlu0 %1428
    %v1432 = vsel %vm98, %v1426, %v1429
    %v1433 = vsel %vm399, %v1432, 0
    %1435 = vmatprep.subr.bf16.mxu0 0
    %1436 = vmatpush1.bf16.msra.mxu0 %v391
    %1437 = vmatprep.subr.bf16.mxu0 0
    %1438 = vmatpush1.bf16.msra.mxu0 %v392
    %1439 = vmatprep.subr.bf16.mxu0 0
    %1440 = vmatpush1.bf16.msra.mxu0 %v393
    %1441 = vmatprep.subr.bf16.mxu0 0
    %1442 = vmatpush1.bf16.msra.mxu0 %v394
    %1443 = vmatprep.subr.bf16.mxu0 0
    %1444 = vmatpush1.bf16.msra.mxu0 0
    %1445 = vmatprep.subr.bf16.mxu0 0
    %1446 = vmatpush1.bf16.msra.mxu0 0
    %1447 = vmatprep.subr.bf16.mxu0 0
    %1448 = vmatpush1.bf16.msra.mxu0 0
    %1449 = vmatprep.subr.bf16.mxu0 0
    %1450 = vmatpush1.bf16.msra.mxu0 0
    %1451 = vmatprep.subr.bf16.mxu0 0
    %1452 = vmatpush1.bf16.msra.mxu0 0
    %1453 = vmatprep.subr.bf16.mxu0 0
    %1454 = vmatpush1.bf16.msra.mxu0 0
    %1455 = vmatprep.subr.bf16.mxu0 0
    %1456 = vmatpush1.bf16.msra.mxu0 0
    %1457 = vmatprep.subr.bf16.mxu0 0
    %1458 = vmatpush1.bf16.msra.mxu0 0
    %1459 = vmatprep.subr.bf16.mxu0 0
    %1460 = vmatpush1.bf16.msra.mxu0 0
    %1461 = vmatprep.subr.bf16.mxu0 0
    %1462 = vmatpush1.bf16.msra.mxu0 0
    %1463 = vmatprep.subr.bf16.mxu0 0
    %1464 = vmatpush1.bf16.msra.mxu0 0
    %1465 = vmatprep.subr.bf16.mxu0 0
    %1466 = vmatpush1.bf16.msra.mxu0 0
    %1467 = vmatprep.mubr.bf16.mxu0 0
    %1468 = vmatmul.mubr.bf16.gmra.mrb[0].mxu0 %v1433
    %v1469 = vpop.f32.mrb[0].mxu0
    %v1470 = vadd.f32 %v373, %v1469
    %v1471 = vpop.f32.mrb[0].mxu0
    %v1472 = vpop.f32.mrb[0].mxu0
    %v1473 = vpop.f32.mrb[0].mxu0
    %1474 = vdwg.mxu0
    %v1475 = vxor.u32 %v1470, 2147483648
    %v1476 = vmul.f32 %v1475, 1.442695
    %v1477 = vpow.pop %v1476
    %v1478 = vadd.f32 %v1477, 1.0
    %v1479 = vrcp.pop %v1478
    %v1480 = vmul.f32 1.0, %v1479
    %1482 = vrot.lane.b32.xlu0 %v1470, 32
    %v1483 = vpop.permute.xlu0 %1482
    %v1485 = vmul.f32 %v1480, %v1483
    %1487 = vrot.lane.b32.xlu0 %v1485, 64
    %v1488 = vpop.permute.xlu0 %1487
    %v1490 = vadd.f32 %v1470, %v1488
    %v1491 = vtanh.pop %v1490
    %v1492 = vsub.f32 %v1417, %v1491
    %1494 = vrot.lane.b32.xlu0 %v1492, 96
    %v1495 = vpop.permute.xlu0 %1494
    %v1497 = vmul.f32 %v1480, %v1495
    %1499 = vrot.lane.b32.xlu0 %v1497, 32
    %v1500 = vpop.permute.xlu0 %1499
    %v1502 = vadd.f32 %v1491, %v1500
    %1504 = vrot.lane.b32.xlu0 %v1502, 64
    %v1505 = vpop.permute.xlu0 %1504
    %1507 = vst.msk [vmem:[%s9 + $0x38] sm:$0xff] %vm98, %v1505
    %v1508 = vld [vmem:[%s9] sm:$0xff]
    %v1509 = vld [vmem:[%s9 + $0x8] sm:$0xff]
    %v1510 = vld [vmem:[%s9 + $0x10] sm:$0xff]
    %v1511 = vld [vmem:[%s9 + $0x18] sm:$0xff]
    %v1512 = vld [vmem:[%s9 + $0x20] sm:$0xff]
    %v1513 = vld [vmem:[%s9 + $0x28] sm:$0xff]
    %v1514 = vld [vmem:[%s9 + $0x30] sm:$0xff]
    %v1515 = vld [vmem:[%s9 + $0x38] sm:$0xff]
    %v1516 = vpack.c.bf16 %v1509, %v1508
    %v1517 = vpack.c.bf16 %v1511, %v1510
    %v1518 = vpack.c.bf16 %v1513, %v1512
    %v1519 = vpack.c.bf16 %v1515, %v1514
    %v1520 = vld [vmem:[%s7] sm:$0xf]
    %v1521 = vld [vmem:[%s7 + $0x4] sm:$0xf]
    %v1522 = vld [vmem:[%s7 + $0x8] sm:$0xf]
    %v1523 = vld [vmem:[%s7 + $0xc] sm:$0xf]
    %v1524 = vld [vmem:[%s8] sm:$0x1]
    %v1526 = vlaneseq
    %v1527 = vshrl.u32 %v1526, 7
    %v1528 = vsub.s32 0, %v1527
    %v1529 = vrot.slane %v1524, %v1528
    %v1535 = vunpack.c.l.b16 %v1520
    %v1536 = vunpack.c.l.b16 %v1521
    %v1537 = vunpack.c.l.b16 %v1522
    %v1538 = vunpack.c.l.b16 %v1523
    %v1539 = vpack.c.b16 %v1536, %v1535
    %v1540 = vpack.c.b16 %v1538, %v1537
    %v1544 = vsel %vm98, %v1516, 0
    %v1547 = vsel %vm98, %v1517, 0
    %v1550 = vsel %vm98, %v1518, 0
    %v1553 = vsel %vm98, %v1519, 0
    %1555 = vmatprep.subr.bf16.mxu0 0
    %1556 = vmatpush1.bf16.msra.mxu0 %v1539
    %1557 = vmatprep.subr.bf16.mxu0 0
    %1558 = vmatpush1.bf16.msra.mxu0 %v1540
    %1559 = vmatprep.subr.bf16.mxu0 0
    %1560 = vmatpush1.bf16.msra.mxu0 0
    %1561 = vmatprep.subr.bf16.mxu0 0
    %1562 = vmatpush1.bf16.msra.mxu0 0
    %1563 = vmatprep.subr.bf16.mxu0 0
    %1564 = vmatpush1.bf16.msra.mxu0 0
    %1565 = vmatprep.subr.bf16.mxu0 0
    %1566 = vmatpush1.bf16.msra.mxu0 0
    %1567 = vmatprep.subr.bf16.mxu0 0
    %1568 = vmatpush1.bf16.msra.mxu0 0
    %1569 = vmatprep.subr.bf16.mxu0 0
    %1570 = vmatpush1.bf16.msra.mxu0 0
    %1571 = vmatprep.subr.bf16.mxu0 0
    %1572 = vmatpush1.bf16.msra.mxu0 0
    %1573 = vmatprep.subr.bf16.mxu0 0
    %1574 = vmatpush1.bf16.msra.mxu0 0
    %1575 = vmatprep.subr.bf16.mxu0 0
    %1576 = vmatpush1.bf16.msra.mxu0 0
    %1577 = vmatprep.subr.bf16.mxu0 0
    %1578 = vmatpush1.bf16.msra.mxu0 0
    %1579 = vmatprep.subr.bf16.mxu0 0
    %1580 = vmatpush1.bf16.msra.mxu0 0
    %1581 = vmatprep.subr.bf16.mxu0 0
    %1582 = vmatpush1.bf16.msra.mxu0 0
    %1583 = vmatprep.subr.bf16.mxu0 0
    %1584 = vmatpush1.bf16.msra.mxu0 0
    %1585 = vmatprep.subr.bf16.mxu0 0
    %1586 = vmatpush1.bf16.msra.mxu0 0
    %1587 = vmatprep.mubr.bf16.mxu0 0
    %1588 = vmatmul.mubr.bf16.gmra.mrb[0].mxu0 %v1544
    %v1589 = vpop.f32.mrb[0].mxu0
    %v1590 = vadd.f32 %v1529, %v1589
    %v1591 = vpop.f32.mrb[0].mxu0
    %v1592 = vpop.f32.mrb[0].mxu0
    %v1593 = vadd.f32 %v1529, %v1592
    %v1594 = vpop.f32.mrb[0].mxu0
    %1595 = vmatprep.mubr.bf16.mxu0 0
    %1596 = vmatmul.mubr.bf16.gmra.mrb[0].mxu0 %v1547
    %v1597 = vpop.f32.mrb[0].mxu0
    %v1598 = vadd.f32 %v1529, %v1597
    %v1599 = vpop.f32.mrb[0].mxu0
    %v1600 = vpop.f32.mrb[0].mxu0
    %v1601 = vadd.f32 %v1529, %v1600
    %v1602 = vpop.f32.mrb[0].mxu0
    %1603 = vmatprep.mubr.bf16.mxu0 0
    %1604 = vmatmul.mubr.bf16.gmra.mrb[0].mxu0 %v1550
    %v1605 = vpop.f32.mrb[0].mxu0
    %v1606 = vadd.f32 %v1529, %v1605
    %v1607 = vpop.f32.mrb[0].mxu0
    %v1608 = vpop.f32.mrb[0].mxu0
    %v1609 = vadd.f32 %v1529, %v1608
    %v1610 = vpop.f32.mrb[0].mxu0
    %1611 = vmatprep.mubr.bf16.mxu0 0
    %1612 = vmatmul.mubr.bf16.gmra.mrb[0].mxu0 %v1553
    %v1613 = vpop.f32.mrb[0].mxu0
    %v1614 = vadd.f32 %v1529, %v1613
    %v1615 = vpop.f32.mrb[0].mxu0
    %v1616 = vpop.f32.mrb[0].mxu0
    %v1617 = vadd.f32 %v1529, %v1616
    %v1618 = vpop.f32.mrb[0].mxu0
    %1619 = vdwg.mxu0
    %v1620 = vxor.u32 %v1590, 2147483648
    %v1621 = vxor.u32 %v1593, 2147483648
    %v1622 = vxor.u32 %v1598, 2147483648
    %v1623 = vxor.u32 %v1601, 2147483648
    %v1624 = vxor.u32 %v1606, 2147483648
    %v1625 = vxor.u32 %v1609, 2147483648
    %v1626 = vxor.u32 %v1614, 2147483648
    %v1627 = vxor.u32 %v1617, 2147483648
    %v1628 = vmul.f32 %v1620, 1.442695
    %v1629 = vpow.pop %v1628
    %v1630 = vmul.f32 %v1621, 1.442695
    %v1631 = vpow.pop %v1630
    %v1632 = vmul.f32 %v1622, 1.442695
    %v1633 = vpow.pop %v1632
    %v1634 = vmul.f32 %v1623, 1.442695
    %v1635 = vpow.pop %v1634
    %v1636 = vmul.f32 %v1624, 1.442695
    %v1637 = vpow.pop %v1636
    %v1638 = vmul.f32 %v1625, 1.442695
    %v1639 = vpow.pop %v1638
    %v1640 = vmul.f32 %v1626, 1.442695
    %v1641 = vpow.pop %v1640
    %v1642 = vmul.f32 %v1627, 1.442695
    %v1643 = vpow.pop %v1642
    %v1644 = vadd.f32 %v1629, 1.0
    %v1645 = vadd.f32 %v1631, 1.0
    %v1646 = vadd.f32 %v1633, 1.0
    %v1647 = vadd.f32 %v1635, 1.0
    %v1648 = vadd.f32 %v1637, 1.0
    %v1649 = vadd.f32 %v1639, 1.0
    %v1650 = vadd.f32 %v1641, 1.0
    %v1651 = vadd.f32 %v1643, 1.0
    %v1652 = vrcp.pop %v1644
    %v1653 = vmul.f32 1.0, %v1652
    %v1654 = vrcp.pop %v1645
    %v1655 = vmul.f32 1.0, %v1654
    %v1656 = vrcp.pop %v1646
    %v1657 = vmul.f32 1.0, %v1656
    %v1658 = vrcp.pop %v1647
    %v1659 = vmul.f32 1.0, %v1658
    %v1660 = vrcp.pop %v1648
    %v1661 = vmul.f32 1.0, %v1660
    %v1662 = vrcp.pop %v1649
    %v1663 = vmul.f32 1.0, %v1662
    %v1664 = vrcp.pop %v1650
    %v1665 = vmul.f32 1.0, %v1664
    %v1666 = vrcp.pop %v1651
    %v1667 = vmul.f32 1.0, %v1666
    %1668 = vst.msk [vmem:[%s9] sm:$0xff] %vm98, %v1653
    %1669 = vst.msk [vmem:[%s9 + $0x8] sm:$0xff] %vm98, %v1655
    %1670 = vst.msk [vmem:[%s9 + $0x10] sm:$0xff] %vm98, %v1657
    %1671 = vst.msk [vmem:[%s9 + $0x18] sm:$0xff] %vm98, %v1659
    %1672 = vst.msk [vmem:[%s9 + $0x20] sm:$0xff] %vm98, %v1661
    %1673 = vst.msk [vmem:[%s9 + $0x28] sm:$0xff] %vm98, %v1663
    %1674 = vst.msk [vmem:[%s9 + $0x30] sm:$0xff] %vm98, %v1665
    %1675 = vst.msk [vmem:[%s9 + $0x38] sm:$0xff] %vm98, %v1667
    // Predicated region
    $region42: #{tpu_custom_call.1} parent=1 // pred_check
      _
    $region43: #{tpu_custom_call.1} parent=1 // pred_check_branch
      %1677 = sbr.rel (0) target = $region45
    $region44: #{tpu_custom_call.1} parent=1 // pred_region
      _
    $region45: #{tpu_custom_call.1} parent=1 // pred_fallthru
      _
    // Predicated region
    $region46: #{tpu_custom_call.1} parent=1 // pred_check
      _
    $region47: #{tpu_custom_call.1} parent=1 // pred_check_branch
      %1679 = sbr.rel (0) target = $region49
    $region48: #{tpu_custom_call.1} parent=1 // pred_region
      _
    $region49: #{tpu_custom_call.1} parent=1 // pred_fallthru
      _
    %1680 = vsyncpa [#allocation4], 1

</llo_original>
